<compile_context>
chip_gen: v7x
topology: tpu7x:2x2x1
jax: 0.10.0
libtpu: 0.0.40
codegen_flags: <defaults>
</compile_context>

<pallas_src>
import jax
import jax.numpy as jnp
from jax import lax
from jax.experimental import pallas as pl
from jax.experimental.pallas import tpu as pltpu


# ---------------------------------------------------------------------------
# Kernel: one batch tile (T rows) of the whole ICM forward.
# Emits per-tile partial sums of squared errors (inverse / forward) into a
# lane-dense (1, 8, 128) f32 output block: lane 0 = inv SSE, lane 1 = forw SSE.
# ---------------------------------------------------------------------------
def icm_kernel(act_ref, st_ref,
               ew1_ref, eb1_ref, ew2_ref, eb2_ref,            # encoder
               fw1a_ref, fw1c_ref, fb1_ref, fw2_ref, fb2_ref,  # forward net
               iw1c_ref, iw1n_ref, ib1_ref, iw2_ref, ib2_ref,  # inverse net
               out_ref):
    cd = ew1_ref.dtype                       # matmul compute dtype (bf16)
    T = st_ref.shape[1]                      # batch-tile rows
    S = st_ref.shape[2]

    act = act_ref[...]                       # (T, A) f32
    states = st_ref[...].reshape(2 * T, S)   # (2T, S): rows [0,T)=curr, [T,2T)=next

    # ---- encoder, fused over curr‖next: one pass on 2T rows ----------------
    h = jnp.dot(states.astype(cd), ew1_ref[...],
                preferred_element_type=jnp.float32) + eb1_ref[...]
    h = jnp.maximum(h, 0.0)
    enc = jnp.dot(h.astype(cd), ew2_ref[...],
                  preferred_element_type=jnp.float32) + eb2_ref[...]
    curr_enc = enc[:T]                       # (T, D) f32
    next_enc = enc[T:]                       # (T, D) f32

    # ---- inverse_net(concat(curr_enc, next_enc)) via pre-split weights -----
    ih = (jnp.dot(curr_enc.astype(cd), iw1c_ref[...], preferred_element_type=jnp.float32)
          + jnp.dot(next_enc.astype(cd), iw1n_ref[...], preferred_element_type=jnp.float32)
          + ib1_ref[...])
    ih = jnp.maximum(ih, 0.0)
    pred_act = jnp.dot(ih.astype(cd), iw2_ref[...],
                       preferred_element_type=jnp.float32) + ib2_ref[...]
    inv_sq = jnp.sum((pred_act - act) ** 2)          # scalar f32 (partial SSE)

    # ---- forward_net(concat(act, curr_enc)) via pre-split weights ----------
    fh = (jnp.dot(act.astype(cd), fw1a_ref[...], preferred_element_type=jnp.float32)
          + jnp.dot(curr_enc.astype(cd), fw1c_ref[...], preferred_element_type=jnp.float32)
          + fb1_ref[...])
    fh = jnp.maximum(fh, 0.0)
    pred_next = jnp.dot(fh.astype(cd), fw2_ref[...],
                        preferred_element_type=jnp.float32) + fb2_ref[...]
    forw_sq = jnp.sum((pred_next - next_enc) ** 2)   # scalar f32 (partial SSE)

    # Lane-dense per-tile output.
    lane = lax.broadcasted_iota(jnp.int32, out_ref.shape, dimension=2)
    out_ref[...] = jnp.where(lane == 0, inv_sq,
                             jnp.where(lane == 1, forw_sq, 0.0))


# ---------------------------------------------------------------------------
# Wrapper: tiling, weight residency, bf16 casts, final tiny scalar reduction.
# ---------------------------------------------------------------------------
def icm_forward(act, curr_state, next_state, params, *,
                tile_b=128, compute_dtype=jnp.bfloat16):
    (ew1, eb1, ew2, eb2,
     fw1, fb1, fw2, fb2,
     iw1, ib1, iw2, ib2) = params

    B, A = act.shape
    S = curr_state.shape[-1]
    D = ew2.shape[-1]

    tile_b = min(tile_b, B)
    assert B % tile_b == 0 and tile_b % 8 == 0, (B, tile_b)
    n_tiles = B // tile_b

    cd = compute_dtype
    # Stack curr/next so one encoder pass handles both halves per tile.
    states = jnp.stack([curr_state, next_state], axis=0)         # (2, B, S)

    # Pre-split the first-layer weights of the concat-consuming nets so the
    # kernel never slices packed bf16 weight refs: (x‖y)@W == x@W_x + y@W_y.
    weights = (ew1.astype(cd), eb1, ew2.astype(cd), eb2,
               fw1[:A].astype(cd), fw1[A:].astype(cd), fb1, fw2.astype(cd), fb2,
               iw1[:D].astype(cd), iw1[D:].astype(cd), ib1, iw2.astype(cd), ib2)

    # Whole weight, constant block index -> DMA'd once, VMEM-resident across grid.
    def resident(w):
        return pl.BlockSpec(w.shape, lambda *_: (0,) * w.ndim)

    in_specs = [pl.BlockSpec((tile_b, A), lambda i: (i, 0)),       # act tile
                pl.BlockSpec((2, tile_b, S), lambda i: (0, i, 0))]  # stacked states tile
    in_specs += [resident(w) for w in weights]

    out_specs = pl.BlockSpec((1, 8, 128), lambda i: (i, 0, 0))

    flops = 2 * B * (2 * (S * D + D * D)       # encoder (curr + next)
                     + (2 * D * D + D * A)     # inverse net
                     + (A * D + 2 * D * D))    # forward net
    bytes_in = (act.size * act.dtype.itemsize
                + states.size * states.dtype.itemsize
                + sum(int(w.size) * w.dtype.itemsize for w in weights))
    bytes_out = n_tiles * 8 * 128 * 4

    partial = pl.pallas_call(
        icm_kernel,
        out_shape=jax.ShapeDtypeStruct((n_tiles, 8, 128), jnp.float32),
        grid_spec=pltpu.PrefetchScalarGridSpec(
            num_scalar_prefetch=0,
            grid=(n_tiles,),
            in_specs=in_specs,
            out_specs=out_specs),
        compiler_params=pltpu.CompilerParams(
            dimension_semantics=("parallel",)),
        cost_estimate=pl.CostEstimate(flops=flops, transcendentals=0,
                                      bytes_accessed=bytes_in + bytes_out),
    )(act, states, *weights)

    # Tiny cross-tile epilogue (kept in JAX so the grid axis stays "parallel").
    inv_loss = jnp.sum(partial[:, 0, 0]) / (B * A)
    forw_loss = 0.5 * jnp.sum(partial[:, 0, 1]) / (B * D)
    loss = 10.0 * (0.2 * forw_loss + 0.8 * inv_loss)
    return jnp.stack([loss, inv_loss, forw_loss])


# ---------------------------------------------------------------------------
# Pure-JAX reference. compute_dtype=f32 reproduces the original PyTorch math;
# compute_dtype=bf16 mirrors the kernel's bf16-operand / f32-accumulate dots.
# ---------------------------------------------------------------------------
def icm_forward_ref(act, curr_state, next_state, params,
                    compute_dtype=jnp.float32):
    (ew1, eb1, ew2, eb2,
     fw1, fb1, fw2, fb2,
     iw1, ib1, iw2, ib2) = params
    cd = compute_dtype

    def ff(x, w1, b1, w2, b2):
        h = jnp.dot(x.astype(cd), w1.astype(cd),
                    preferred_element_type=jnp.float32) + b1
        h = jnp.maximum(h, 0.0)
        return jnp.dot(h.astype(cd), w2.astype(cd),
                       preferred_element_type=jnp.float32) + b2

    curr_enc = ff(curr_state, ew1, eb1, ew2, eb2)
    next_enc = ff(next_state, ew1, eb1, ew2, eb2)
    pred_act = ff(jnp.concatenate([curr_enc, next_enc], -1), iw1, ib1, iw2, ib2)
    inv_loss = jnp.mean((pred_act - act) ** 2)
    pred_next = ff(jnp.concatenate([act, curr_enc], -1), fw1, fb1, fw2, fb2)
    forw_loss = jnp.mean(jnp.mean(0.5 * (pred_next - next_enc) ** 2, -1))
    loss = 10.0 * (0.2 * forw_loss + 0.8 * inv_loss)
    return jnp.stack([loss, inv_loss, forw_loss])


# ---------------------------------------------------------------------------
# Deterministic PyTorch-nn.Linear-style init (uniform ±1/sqrt(fan_in)).
# ---------------------------------------------------------------------------
def init_linear(key, in_dim, out_dim):
    kw, kb = jax.random.split(key)
    bound = 1.0 / jnp.sqrt(jnp.float32(in_dim))
    w = jax.random.uniform(kw, (in_dim, out_dim), jnp.float32, -bound, bound)
    b = jax.random.uniform(kb, (1, out_dim), jnp.float32, -bound, bound)
    return w, b


if __name__ == "__main__":
    BATCH = 256         # tiled into 128-row grid steps (grid = 2)
    TILE_B = 128
    STATE_SIZE = 16
    ACTION_SIZE = 8
    D_MODEL = 128       # module default

    key = jax.random.PRNGKey(0)
    (k_act, k_cs, k_ns,
     k_e1, k_e2, k_f1, k_f2, k_i1, k_i2) = jax.random.split(key, 9)

    # continuous (float) actions -> discrete one-hot branch is skipped
    act = jax.random.normal(k_act, (BATCH, ACTION_SIZE), jnp.float32)
    curr_state = jax.random.normal(k_cs, (BATCH, STATE_SIZE), jnp.float32)
    next_state = jax.random.normal(k_ns, (BATCH, STATE_SIZE), jnp.float32)

    # encoder: FeedForward(state_size, d_model, d_model)
    ew1, eb1 = init_linear(k_e1, STATE_SIZE, D_MODEL)
    ew2, eb2 = init_linear(k_e2, D_MODEL, D_MODEL)
    # forward_net: FeedForward(d_model + action_size, d_model, d_model)
    fw1, fb1 = init_linear(k_f1, ACTION_SIZE + D_MODEL, D_MODEL)
    fw2, fb2 = init_linear(k_f2, D_MODEL, D_MODEL)
    # inverse_net: FeedForward(2 * d_model, action_size, d_model)
    iw1, ib1 = init_linear(k_i1, 2 * D_MODEL, D_MODEL)
    iw2, ib2 = init_linear(k_i2, D_MODEL, ACTION_SIZE)

    params = (ew1, eb1, ew2, eb2,
              fw1, fb1, fw2, fb2,
              iw1, ib1, iw2, ib2)

    out = icm_forward(act, curr_state, next_state, params, tile_b=TILE_B)
    out = jax.block_until_ready(out)

    # Tight check vs. a reference using the same bf16-operand / f32-acc dots.
    ref_bf16 = icm_forward_ref(act, curr_state, next_state, params,
                               compute_dtype=jnp.bfloat16)
    assert jnp.allclose(out, ref_bf16, rtol=5e-3, atol=1e-4), (out, ref_bf16)

    # Loose semantic check vs. the pure-f32 original-module math.
    ref_f32 = icm_forward_ref(act, curr_state, next_state, params,
                              compute_dtype=jnp.float32)
    assert jnp.allclose(out, ref_f32, rtol=5e-2, atol=1e-3), (out, ref_f32)

    print("KERNEL_OK")
</pallas_src>

<mosaic_0001>
module attributes {stable_mosaic.version = 11 : i64} {
  func.func @icm_kernel(%arg0: i32, %arg1: memref<128x8xf32, #tpu.memory_space<vmem>>, %arg2: memref<2x128x16xf32, #tpu.memory_space<vmem>>, %arg3: memref<16x128xbf16, #tpu.memory_space<vmem>>, %arg4: memref<1x128xf32, #tpu.memory_space<vmem>>, %arg5: memref<128x128xbf16, #tpu.memory_space<vmem>>, %arg6: memref<1x128xf32, #tpu.memory_space<vmem>>, %arg7: memref<8x128xbf16, #tpu.memory_space<vmem>>, %arg8: memref<128x128xbf16, #tpu.memory_space<vmem>>, %arg9: memref<1x128xf32, #tpu.memory_space<vmem>>, %arg10: memref<128x128xbf16, #tpu.memory_space<vmem>>, %arg11: memref<1x128xf32, #tpu.memory_space<vmem>>, %arg12: memref<128x128xbf16, #tpu.memory_space<vmem>>, %arg13: memref<128x128xbf16, #tpu.memory_space<vmem>>, %arg14: memref<1x128xf32, #tpu.memory_space<vmem>>, %arg15: memref<128x8xbf16, #tpu.memory_space<vmem>>, %arg16: memref<1x8xf32, #tpu.memory_space<vmem>>, %arg17: memref<1x8x128xf32, #tpu.memory_space<vmem>>) attributes {dimension_semantics = [#tpu.dimension_semantics<parallel>], iteration_bounds = array<i64: 2>, scalar_prefetch = 0 : i64, scratch_operands = 0 : i64, tpu.core_type = #tpu.core_type<tc>, window_params = [{transform_indices = @transform_0, window_bounds = array<i64: 128, 8>}, {transform_indices = @transform_1, window_bounds = array<i64: 2, 128, 16>}, {pipeline_mode = #tpu.pipeline_mode<synchronous>, transform_indices = @transform_2, window_bounds = array<i64: 16, 128>}, {pipeline_mode = #tpu.pipeline_mode<synchronous>, transform_indices = @transform_3, window_bounds = array<i64: 1, 128>}, {pipeline_mode = #tpu.pipeline_mode<synchronous>, transform_indices = @transform_4, window_bounds = array<i64: 128, 128>}, {pipeline_mode = #tpu.pipeline_mode<synchronous>, transform_indices = @transform_5, window_bounds = array<i64: 1, 128>}, {pipeline_mode = #tpu.pipeline_mode<synchronous>, transform_indices = @transform_6, window_bounds = array<i64: 8, 128>}, {pipeline_mode = #tpu.pipeline_mode<synchronous>, transform_indices = @transform_7, window_bounds = array<i64: 128, 128>}, {pipeline_mode = #tpu.pipeline_mode<synchronous>, transform_indices = @transform_8, window_bounds = array<i64: 1, 128>}, {pipeline_mode = #tpu.pipeline_mode<synchronous>, transform_indices = @transform_9, window_bounds = array<i64: 128, 128>}, {pipeline_mode = #tpu.pipeline_mode<synchronous>, transform_indices = @transform_10, window_bounds = array<i64: 1, 128>}, {pipeline_mode = #tpu.pipeline_mode<synchronous>, transform_indices = @transform_11, window_bounds = array<i64: 128, 128>}, {pipeline_mode = #tpu.pipeline_mode<synchronous>, transform_indices = @transform_12, window_bounds = array<i64: 128, 128>}, {pipeline_mode = #tpu.pipeline_mode<synchronous>, transform_indices = @transform_13, window_bounds = array<i64: 1, 128>}, {pipeline_mode = #tpu.pipeline_mode<synchronous>, transform_indices = @transform_14, window_bounds = array<i64: 128, 8>}, {pipeline_mode = #tpu.pipeline_mode<synchronous>, transform_indices = @transform_15, window_bounds = array<i64: 1, 8>}, {transform_indices = @transform_16, window_bounds = array<i64: 1, 8, 128>}]} {
    %c0 = arith.constant 0 : index
    %c0_0 = arith.constant 0 : index
    %0 = vector.load %arg1[%c0, %c0_0] : memref<128x8xf32, #tpu.memory_space<vmem>>, vector<128x8xf32>
    %c0_1 = arith.constant 0 : index
    %c0_2 = arith.constant 0 : index
    %c0_3 = arith.constant 0 : index
    %1 = vector.load %arg2[%c0_1, %c0_2, %c0_3] : memref<2x128x16xf32, #tpu.memory_space<vmem>>, vector<2x128x16xf32>
    %2 = vector.shape_cast %1 : vector<2x128x16xf32> to vector<256x16xf32>
    %3 = arith.truncf %2 : vector<256x16xf32> to vector<256x16xbf16>
    %c0_4 = arith.constant 0 : index
    %c0_5 = arith.constant 0 : index
    %4 = vector.load %arg3[%c0_4, %c0_5] : memref<16x128xbf16, #tpu.memory_space<vmem>>, vector<16x128xbf16>
    %cst = arith.constant dense<0.000000e+00> : vector<256x128xf32>
    %5 = tpu.matmul %3, %4, %cst {dimension_numbers = #tpu.dot_dimension_numbers<[1], [0], [0], [1], [0, 0, 1, 1], [], []>} : vector<256x16xbf16>, vector<16x128xbf16>, vector<256x128xf32> -> vector<256x128xf32>
    %c0_6 = arith.constant 0 : index
    %c0_7 = arith.constant 0 : index
    %6 = vector.load %arg4[%c0_6, %c0_7] : memref<1x128xf32, #tpu.memory_space<vmem>>, vector<1x128xf32>
    %7 = vector.broadcast %6 : vector<1x128xf32> to vector<256x128xf32>
    %8 = arith.addf %5, %7 : vector<256x128xf32>
    %cst_8 = arith.constant 0.000000e+00 : f32
    %9 = vector.broadcast %cst_8 : f32 to vector<256x128xf32>
    %10 = arith.maximumf %8, %9 : vector<256x128xf32>
    %11 = arith.truncf %10 : vector<256x128xf32> to vector<256x128xbf16>
    %c0_9 = arith.constant 0 : index
    %c0_10 = arith.constant 0 : index
    %12 = vector.load %arg5[%c0_9, %c0_10] : memref<128x128xbf16, #tpu.memory_space<vmem>>, vector<128x128xbf16>
    %cst_11 = arith.constant dense<0.000000e+00> : vector<256x128xf32>
    %13 = tpu.matmul %11, %12, %cst_11 {dimension_numbers = #tpu.dot_dimension_numbers<[1], [0], [0], [1], [0, 0, 1, 1], [], []>} : vector<256x128xbf16>, vector<128x128xbf16>, vector<256x128xf32> -> vector<256x128xf32>
    %c0_12 = arith.constant 0 : index
    %c0_13 = arith.constant 0 : index
    %14 = vector.load %arg6[%c0_12, %c0_13] : memref<1x128xf32, #tpu.memory_space<vmem>>, vector<1x128xf32>
    %15 = vector.broadcast %14 : vector<1x128xf32> to vector<256x128xf32>
    %16 = arith.addf %13, %15 : vector<256x128xf32>
    %17 = vector.extract_strided_slice %16 {offsets = [0, 0], sizes = [128, 128], strides = [1, 1]} : vector<256x128xf32> to vector<128x128xf32>
    %18 = vector.extract_strided_slice %16 {offsets = [128, 0], sizes = [128, 128], strides = [1, 1]} : vector<256x128xf32> to vector<128x128xf32>
    %19 = arith.truncf %17 : vector<128x128xf32> to vector<128x128xbf16>
    %c0_14 = arith.constant 0 : index
    %c0_15 = arith.constant 0 : index
    %20 = vector.load %arg12[%c0_14, %c0_15] : memref<128x128xbf16, #tpu.memory_space<vmem>>, vector<128x128xbf16>
    %cst_16 = arith.constant dense<0.000000e+00> : vector<128x128xf32>
    %21 = tpu.matmul %19, %20, %cst_16 {dimension_numbers = #tpu.dot_dimension_numbers<[1], [0], [0], [1], [0, 0, 1, 1], [], []>} : vector<128x128xbf16>, vector<128x128xbf16>, vector<128x128xf32> -> vector<128x128xf32>
    %22 = arith.truncf %18 : vector<128x128xf32> to vector<128x128xbf16>
    %c0_17 = arith.constant 0 : index
    %c0_18 = arith.constant 0 : index
    %23 = vector.load %arg13[%c0_17, %c0_18] : memref<128x128xbf16, #tpu.memory_space<vmem>>, vector<128x128xbf16>
    %cst_19 = arith.constant dense<0.000000e+00> : vector<128x128xf32>
    %24 = tpu.matmul %22, %23, %cst_19 {dimension_numbers = #tpu.dot_dimension_numbers<[1], [0], [0], [1], [0, 0, 1, 1], [], []>} : vector<128x128xbf16>, vector<128x128xbf16>, vector<128x128xf32> -> vector<128x128xf32>
    %25 = arith.addf %21, %24 : vector<128x128xf32>
    %c0_20 = arith.constant 0 : index
    %c0_21 = arith.constant 0 : index
    %26 = vector.load %arg14[%c0_20, %c0_21] : memref<1x128xf32, #tpu.memory_space<vmem>>, vector<1x128xf32>
    %27 = vector.broadcast %26 : vector<1x128xf32> to vector<128x128xf32>
    %28 = arith.addf %25, %27 : vector<128x128xf32>
    %cst_22 = arith.constant 0.000000e+00 : f32
    %29 = vector.broadcast %cst_22 : f32 to vector<128x128xf32>
    %30 = arith.maximumf %28, %29 : vector<128x128xf32>
    %31 = arith.truncf %30 : vector<128x128xf32> to vector<128x128xbf16>
    %c0_23 = arith.constant 0 : index
    %c0_24 = arith.constant 0 : index
    %32 = vector.load %arg15[%c0_23, %c0_24] : memref<128x8xbf16, #tpu.memory_space<vmem>>, vector<128x8xbf16>
    %cst_25 = arith.constant dense<0.000000e+00> : vector<128x8xf32>
    %33 = tpu.matmul %31, %32, %cst_25 {dimension_numbers = #tpu.dot_dimension_numbers<[1], [0], [0], [1], [0, 0, 1, 1], [], []>} : vector<128x128xbf16>, vector<128x8xbf16>, vector<128x8xf32> -> vector<128x8xf32>
    %c0_26 = arith.constant 0 : index
    %c0_27 = arith.constant 0 : index
    %34 = vector.load %arg16[%c0_26, %c0_27] : memref<1x8xf32, #tpu.memory_space<vmem>>, vector<1x8xf32>
    %35 = vector.broadcast %34 : vector<1x8xf32> to vector<128x8xf32>
    %36 = arith.addf %33, %35 : vector<128x8xf32>
    %37 = arith.subf %36, %0 : vector<128x8xf32>
    %38 = arith.mulf %37, %37 : vector<128x8xf32>
    %39 = vector.shape_cast %38 : vector<128x8xf32> to vector<1x128x8xf32>
    %cst_28 = arith.constant dense<0.000000e+00> : vector<1xf32>
    %40 = vector.multi_reduction <add>, %39, %cst_28 [1, 2] : vector<1x128x8xf32> to vector<1xf32>
    %41 = vector.shape_cast %40 : vector<1xf32> to vector<1x1x1xf32>
    %42 = vector.extract %41[0, 0, 0] : f32 from vector<1x1x1xf32>
    %43 = arith.truncf %0 : vector<128x8xf32> to vector<128x8xbf16>
    %c0_29 = arith.constant 0 : index
    %c0_30 = arith.constant 0 : index
    %44 = vector.load %arg7[%c0_29, %c0_30] : memref<8x128xbf16, #tpu.memory_space<vmem>>, vector<8x128xbf16>
    %cst_31 = arith.constant dense<0.000000e+00> : vector<128x128xf32>
    %45 = tpu.matmul %43, %44, %cst_31 {dimension_numbers = #tpu.dot_dimension_numbers<[1], [0], [0], [1], [0, 0, 1, 1], [], []>} : vector<128x8xbf16>, vector<8x128xbf16>, vector<128x128xf32> -> vector<128x128xf32>
    %46 = arith.truncf %17 : vector<128x128xf32> to vector<128x128xbf16>
    %c0_32 = arith.constant 0 : index
    %c0_33 = arith.constant 0 : index
    %47 = vector.load %arg8[%c0_32, %c0_33] : memref<128x128xbf16, #tpu.memory_space<vmem>>, vector<128x128xbf16>
    %cst_34 = arith.constant dense<0.000000e+00> : vector<128x128xf32>
    %48 = tpu.matmul %46, %47, %cst_34 {dimension_numbers = #tpu.dot_dimension_numbers<[1], [0], [0], [1], [0, 0, 1, 1], [], []>} : vector<128x128xbf16>, vector<128x128xbf16>, vector<128x128xf32> -> vector<128x128xf32>
    %49 = arith.addf %45, %48 : vector<128x128xf32>
    %c0_35 = arith.constant 0 : index
    %c0_36 = arith.constant 0 : index
    %50 = vector.load %arg9[%c0_35, %c0_36] : memref<1x128xf32, #tpu.memory_space<vmem>>, vector<1x128xf32>
    %51 = vector.broadcast %50 : vector<1x128xf32> to vector<128x128xf32>
    %52 = arith.addf %49, %51 : vector<128x128xf32>
    %cst_37 = arith.constant 0.000000e+00 : f32
    %53 = vector.broadcast %cst_37 : f32 to vector<128x128xf32>
    %54 = arith.maximumf %52, %53 : vector<128x128xf32>
    %55 = arith.truncf %54 : vector<128x128xf32> to vector<128x128xbf16>
    %c0_38 = arith.constant 0 : index
    %c0_39 = arith.constant 0 : index
    %56 = vector.load %arg10[%c0_38, %c0_39] : memref<128x128xbf16, #tpu.memory_space<vmem>>, vector<128x128xbf16>
    %cst_40 = arith.constant dense<0.000000e+00> : vector<128x128xf32>
    %57 = tpu.matmul %55, %56, %cst_40 {dimension_numbers = #tpu.dot_dimension_numbers<[1], [0], [0], [1], [0, 0, 1, 1], [], []>} : vector<128x128xbf16>, vector<128x128xbf16>, vector<128x128xf32> -> vector<128x128xf32>
    %c0_41 = arith.constant 0 : index
    %c0_42 = arith.constant 0 : index
    %58 = vector.load %arg11[%c0_41, %c0_42] : memref<1x128xf32, #tpu.memory_space<vmem>>, vector<1x128xf32>
    %59 = vector.broadcast %58 : vector<1x128xf32> to vector<128x128xf32>
    %60 = arith.addf %57, %59 : vector<128x128xf32>
    %61 = arith.subf %60, %18 : vector<128x128xf32>
    %62 = arith.mulf %61, %61 : vector<128x128xf32>
    %63 = vector.shape_cast %62 : vector<128x128xf32> to vector<1x128x128xf32>
    %cst_43 = arith.constant dense<0.000000e+00> : vector<1xf32>
    %64 = vector.multi_reduction <add>, %63, %cst_43 [1, 2] : vector<1x128x128xf32> to vector<1xf32>
    %65 = vector.shape_cast %64 : vector<1xf32> to vector<1x1x1xf32>
    %66 = vector.extract %65[0, 0, 0] : f32 from vector<1x1x1xf32>
    %67 = tpu.iota {dimensions = array<i32: 2>} : vector<1x8x128xi32>
    %c0_i32 = arith.constant 0 : i32
    %68 = vector.broadcast %c0_i32 : i32 to vector<1x8x128xi32>
    %69 = arith.cmpi eq, %67, %68 : vector<1x8x128xi32>
    %c1_i32 = arith.constant 1 : i32
    %70 = vector.broadcast %c1_i32 : i32 to vector<1x8x128xi32>
    %71 = arith.cmpi eq, %67, %70 : vector<1x8x128xi32>
    %cst_44 = arith.constant 0.000000e+00 : f32
    %72 = vector.broadcast %66 : f32 to vector<1x8x128xf32>
    %73 = vector.broadcast %cst_44 : f32 to vector<1x8x128xf32>
    %74 = arith.select %71, %72, %73 : vector<1x8x128xi1>, vector<1x8x128xf32>
    %75 = vector.broadcast %42 : f32 to vector<1x8x128xf32>
    %76 = arith.select %69, %75, %74 : vector<1x8x128xi1>, vector<1x8x128xf32>
    %c0_45 = arith.constant 0 : index
    %c0_46 = arith.constant 0 : index
    %c0_47 = arith.constant 0 : index
    %77 = vector.load %arg17[%c0_45, %c0_46, %c0_47] : memref<1x8x128xf32, #tpu.memory_space<vmem>>, vector<1x8x128xf32>
    tpu.vector_store %arg17[%c0_45, %c0_46, %c0_47], %76 {strides = array<i32>} : memref<1x8x128xf32, #tpu.memory_space<vmem>>, vector<1x8x128xf32>,
    return
  }
  func.func @transform_0(%arg0: i32) -> (i32, i32) {
    %c0_i32 = arith.constant 0 : i32
    %c0_i32_0 = arith.constant 0 : i32
    return %arg0, %c0_i32 : i32, i32
  }
  func.func @transform_1(%arg0: i32) -> (i32, i32, i32) {
    %c0_i32 = arith.constant 0 : i32
    %c0_i32_0 = arith.constant 0 : i32
    %c0_i32_1 = arith.constant 0 : i32
    return %c0_i32, %arg0, %c0_i32_0 : i32, i32, i32
  }
  func.func @transform_2(%arg0: i32) -> (i32, i32) {
    %c0_i32 = arith.constant 0 : i32
    %c0_i32_0 = arith.constant 0 : i32
    %c0_i32_1 = arith.constant 0 : i32
    return %c0_i32, %c0_i32_0 : i32, i32
  }
  func.func @transform_3(%arg0: i32) -> (i32, i32) {
    %c0_i32 = arith.constant 0 : i32
    %c0_i32_0 = arith.constant 0 : i32
    %c0_i32_1 = arith.constant 0 : i32
    return %c0_i32, %c0_i32_0 : i32, i32
  }
  func.func @transform_4(%arg0: i32) -> (i32, i32) {
    %c0_i32 = arith.constant 0 : i32
    %c0_i32_0 = arith.constant 0 : i32
    %c0_i32_1 = arith.constant 0 : i32
    return %c0_i32, %c0_i32_0 : i32, i32
  }
  func.func @transform_5(%arg0: i32) -> (i32, i32) {
    %c0_i32 = arith.constant 0 : i32
    %c0_i32_0 = arith.constant 0 : i32
    %c0_i32_1 = arith.constant 0 : i32
    return %c0_i32, %c0_i32_0 : i32, i32
  }
  func.func @transform_6(%arg0: i32) -> (i32, i32) {
    %c0_i32 = arith.constant 0 : i32
    %c0_i32_0 = arith.constant 0 : i32
    %c0_i32_1 = arith.constant 0 : i32
    return %c0_i32, %c0_i32_0 : i32, i32
  }
  func.func @transform_7(%arg0: i32) -> (i32, i32) {
    %c0_i32 = arith.constant 0 : i32
    %c0_i32_0 = arith.constant 0 : i32
    %c0_i32_1 = arith.constant 0 : i32
    return %c0_i32, %c0_i32_0 : i32, i32
  }
  func.func @transform_8(%arg0: i32) -> (i32, i32) {
    %c0_i32 = arith.constant 0 : i32
    %c0_i32_0 = arith.constant 0 : i32
    %c0_i32_1 = arith.constant 0 : i32
    return %c0_i32, %c0_i32_0 : i32, i32
  }
  func.func @transform_9(%arg0: i32) -> (i32, i32) {
    %c0_i32 = arith.constant 0 : i32
    %c0_i32_0 = arith.constant 0 : i32
    %c0_i32_1 = arith.constant 0 : i32
    return %c0_i32, %c0_i32_0 : i32, i32
  }
  func.func @transform_10(%arg0: i32) -> (i32, i32) {
    %c0_i32 = arith.constant 0 : i32
    %c0_i32_0 = arith.constant 0 : i32
    %c0_i32_1 = arith.constant 0 : i32
    return %c0_i32, %c0_i32_0 : i32, i32
  }
  func.func @transform_11(%arg0: i32) -> (i32, i32) {
    %c0_i32 = arith.constant 0 : i32
    %c0_i32_0 = arith.constant 0 : i32
    %c0_i32_1 = arith.constant 0 : i32
    return %c0_i32, %c0_i32_0 : i32, i32
  }
  func.func @transform_12(%arg0: i32) -> (i32, i32) {
    %c0_i32 = arith.constant 0 : i32
    %c0_i32_0 = arith.constant 0 : i32
    %c0_i32_1 = arith.constant 0 : i32
    return %c0_i32, %c0_i32_0 : i32, i32
  }
  func.func @transform_13(%arg0: i32) -> (i32, i32) {
    %c0_i32 = arith.constant 0 : i32
    %c0_i32_0 = arith.constant 0 : i32
    %c0_i32_1 = arith.constant 0 : i32
    return %c0_i32, %c0_i32_0 : i32, i32
  }
  func.func @transform_14(%arg0: i32) -> (i32, i32) {
    %c0_i32 = arith.constant 0 : i32
    %c0_i32_0 = arith.constant 0 : i32
    %c0_i32_1 = arith.constant 0 : i32
    return %c0_i32, %c0_i32_0 : i32, i32
  }
  func.func @transform_15(%arg0: i32) -> (i32, i32) {
    %c0_i32 = arith.constant 0 : i32
    %c0_i32_0 = arith.constant 0 : i32
    %c0_i32_1 = arith.constant 0 : i32
    return %c0_i32, %c0_i32_0 : i32, i32
  }
  func.func @transform_16(%arg0: i32) -> (i32, i32, i32) {
    %c0_i32 = arith.constant 0 : i32
    %c0_i32_0 = arith.constant 0 : i32
    %c0_i32_1 = arith.constant 0 : i32
    return %arg0, %c0_i32, %c0_i32_0 : i32, i32, i32
  }
}

</mosaic_0001>

<llo_original>
// kernel: tpu_custom_call.1
$region0: #{tpu_custom_call.1}
  #allocation0 [shape = 'u32[]', space=smem, size = 0x4, offset = 0x4, fixed_abs, tag = 'smem constant byte address 0x4 - core index']
  #allocation1 [shape = 'u32[144,128]{1,0:T(1,128)}', space=vmem, size = 0x12000, scoped, tag = 'internal scratch']
  %s0 = inlined_call_operand.vmem [shape: f32[256,8], index: 0, kind: input, shape index: {}]
  %s1 = inlined_call_operand.vmem [shape: f32[2,256,16], index: 1, kind: input, shape index: {}]
  %s2 = inlined_call_operand.vmem [shape: bf16[16,128], index: 2, kind: input, shape index: {}]
  %s3 = inlined_call_operand.vmem [shape: f32[1,128], index: 3, kind: input, shape index: {}]
  %s4 = inlined_call_operand.vmem [shape: bf16[128,128], index: 4, kind: input, shape index: {}]
  %s5 = inlined_call_operand.vmem [shape: f32[1,128], index: 5, kind: input, shape index: {}]
  %s6 = inlined_call_operand.vmem [shape: bf16[8,128], index: 6, kind: input, shape index: {}]
  %s7 = inlined_call_operand.vmem [shape: bf16[128,128], index: 7, kind: input, shape index: {}]
  %s8 = inlined_call_operand.vmem [shape: f32[1,128], index: 8, kind: input, shape index: {}]
  %s9 = inlined_call_operand.vmem [shape: bf16[128,128], index: 9, kind: input, shape index: {}]
  %s10 = inlined_call_operand.vmem [shape: f32[1,128], index: 10, kind: input, shape index: {}]
  %s11 = inlined_call_operand.vmem [shape: bf16[128,128], index: 11, kind: input, shape index: {}]
  %s12 = inlined_call_operand.vmem [shape: bf16[128,128], index: 12, kind: input, shape index: {}]
  %s13 = inlined_call_operand.vmem [shape: f32[1,128], index: 13, kind: input, shape index: {}]
  %s14 = inlined_call_operand.vmem [shape: bf16[128,8], index: 14, kind: input, shape index: {}]
  %s15 = inlined_call_operand.vmem [shape: f32[1,8], index: 15, kind: input, shape index: {}]
  %s16 = inlined_call_operand.hbm [shape: f32[2,8,128], index: 16, kind: output, shape index: {}]
  %s17 = sld [smem:[#allocation0]]
  $region135: #{tpu_custom_call.1} parent=0
    _
  %s19 = ssub.s32 1, %s17
  %s20 = scalar_select 0, %s19, %s17
  $region1: #{tpu_custom_call.1} parent=0
    #allocation2 [shape = 'u8[262144]{0}', space=vmem, size = 0x40000, scoped, tag = 'input window, operand 1']
    #allocation3 [shape = 'u8[8192]{0}', space=vmem, size = 0x2000, scoped, tag = 'output window, operand 0']
    #allocation4 [shape = 's32[2]{0}', space=sflag, size = 0x8, scoped, tag = 'scoped memory for tpu_custom_call.1']
    %21 = vsyncpa [#allocation4], 0
    %s22 = scalar_lea.sflag [#allocation4], 1
    %23 = vsyncpa %s22, 0
    loop: start=0, step=1, limit=4
    $region2: #{tpu_custom_call.1} parent=1 // loop_pre_header
      _
    $region3: #{tpu_custom_call.1} parent=1 // loop_header
      %s25 = sphi 0, %s29
      %p26 = scmp.ge.s32.totalorder %s25, 4
      %s35 = sphi 0, %s37
      %s38 = sphi 0, %s35
      %s39 = sphi 0, %s38
      %s55 = sphi 0, %s39
      %s61 = sphi 0, %s63
      %s64 = sphi 0, %s61
      %s65 = sphi 0, %s64
      %s81 = sphi 0, %s65
      %s85 = sphi 0, %s85
      %s87 = sphi 0, %s85
      %s88 = sphi 0, %s87
      %s102 = sphi 0, %s88
      %s106 = sphi 0, %s106
      %s108 = sphi 0, %s106
      %s109 = sphi 0, %s108
      %s123 = sphi 0, %s109
      %s127 = sphi 0, %s127
      %s129 = sphi 0, %s127
      %s130 = sphi 0, %s129
      %s144 = sphi 0, %s130
      %s148 = sphi 0, %s148
      %s150 = sphi 0, %s148
      %s151 = sphi 0, %s150
      %s165 = sphi 0, %s151
      %s169 = sphi 0, %s169
      %s171 = sphi 0, %s169
      %s172 = sphi 0, %s171
      %s186 = sphi 0, %s172
      %s190 = sphi 0, %s190
      %s192 = sphi 0, %s190
      %s193 = sphi 0, %s192
      %s207 = sphi 0, %s193
      %s211 = sphi 0, %s211
      %s213 = sphi 0, %s211
      %s214 = sphi 0, %s213
      %s228 = sphi 0, %s214
      %s232 = sphi 0, %s232
      %s234 = sphi 0, %s232
      %s235 = sphi 0, %s234
      %s249 = sphi 0, %s235
      %s253 = sphi 0, %s253
      %s255 = sphi 0, %s253
      %s256 = sphi 0, %s255
      %s270 = sphi 0, %s256
      %s274 = sphi 0, %s274
      %s276 = sphi 0, %s274
      %s277 = sphi 0, %s276
      %s291 = sphi 0, %s277
      %s295 = sphi 0, %s295
      %s297 = sphi 0, %s295
      %s298 = sphi 0, %s297
      %s312 = sphi 0, %s298
      %s316 = sphi 0, %s316
      %s318 = sphi 0, %s316
      %s319 = sphi 0, %s318
      %s333 = sphi 0, %s319
      %s337 = sphi 0, %s337
      %s339 = sphi 0, %s337
      %s340 = sphi 0, %s339
      %s354 = sphi 0, %s340
      %s358 = sphi 0, %s358
      %s360 = sphi 0, %s358
      %s361 = sphi 0, %s360
      %s375 = sphi 0, %s361
      %s381 = sphi 0, %s383
      %s384 = sphi 0, %s381
      %s385 = sphi 0, %s384
      %s401 = sphi 0, %s385
    $region4: #{tpu_custom_call.1} parent=1 // loop_header_branch
      %28 = sbr.rel (%p26) target = $region8
    $region5: #{tpu_custom_call.1} parent=1 // loop_body
      %s30 = ssub.s32 %s25, 1
      %s31 = ssub.s32 %s25, 2
      %s32 = sadd.s32 %s25, 1
      %s33 = ssub.s32 %s25, %s32
      %p34 = scmp.eq.s32.totalorder %s33, 0
      %s36 = sadd.s32 %s35, 1
      %s37 = scalar_select %p34, %s35, %s36
      %p40 = pneg %p34
      %p41 = scmp.eq.s32.totalorder %s25, 1
      %p42 = por %p40, %p41
      %p43 = scmp.ne.s32.totalorder %s35, %s38
      %p44 = scmp.eq.s32.totalorder %s25, 0
      %p45 = por %p43, %p44
      %p46 = scmp.ne.s32.totalorder %s35, %s38
      %p47 = scmp.eq.s32.totalorder %s30, 1
      %p48 = por %p46, %p47
      %p49 = scmp.ne.s32.totalorder %s38, %s39
      %p50 = scmp.eq.s32.totalorder %s30, 0
      %p51 = por %p49, %p50
      %p52 = scmp.ne.s32.totalorder %s38, %s39
      %p53 = scmp.eq.s32.totalorder %s31, 1
      %p54 = por %p52, %p53
      %p56 = scmp.ne.s32.totalorder %s39, %s55
      %p57 = scmp.eq.s32.totalorder %s31, 0
      %p58 = por %p56, %p57
      %s59 = ssub.s32 %s25, %s32
      %p60 = scmp.eq.s32.totalorder %s59, 0
      %s62 = sadd.s32 %s61, 1
      %s63 = scalar_select %p60, %s61, %s62
      %p66 = pneg %p60
      %p67 = scmp.eq.s32.totalorder %s25, 1
      %p68 = por %p66, %p67
      %p69 = scmp.ne.s32.totalorder %s61, %s64
      %p70 = scmp.eq.s32.totalorder %s25, 0
      %p71 = por %p69, %p70
      %p72 = scmp.ne.s32.totalorder %s61, %s64
      %p73 = scmp.eq.s32.totalorder %s30, 1
      %p74 = por %p72, %p73
      %p75 = scmp.ne.s32.totalorder %s64, %s65
      %p76 = scmp.eq.s32.totalorder %s30, 0
      %p77 = por %p75, %p76
      %p78 = scmp.ne.s32.totalorder %s64, %s65
      %p79 = scmp.eq.s32.totalorder %s31, 1
      %p80 = por %p78, %p79
      %p82 = scmp.ne.s32.totalorder %s65, %s81
      %p83 = scmp.eq.s32.totalorder %s31, 0
      %p84 = por %p82, %p83
      %s86 = sadd.s32 %s85, 1
      %p89 = scmp.eq.s32.totalorder %s25, 1
      %p90 = scmp.ne.s32.totalorder %s85, %s87
      %p91 = scmp.eq.s32.totalorder %s25, 0
      %p92 = por %p90, %p91
      %p93 = scmp.ne.s32.totalorder %s85, %s87
      %p94 = scmp.eq.s32.totalorder %s30, 1
      %p95 = por %p93, %p94
      %p96 = scmp.ne.s32.totalorder %s87, %s88
      %p97 = scmp.eq.s32.totalorder %s30, 0
      %p98 = por %p96, %p97
      %p99 = scmp.ne.s32.totalorder %s87, %s88
      %p100 = scmp.eq.s32.totalorder %s31, 1
      %p101 = por %p99, %p100
      %p103 = scmp.ne.s32.totalorder %s88, %s102
      %p104 = scmp.eq.s32.totalorder %s31, 0
      %p105 = por %p103, %p104
      %s107 = sadd.s32 %s106, 1
      %p110 = scmp.eq.s32.totalorder %s25, 1
      %p111 = scmp.ne.s32.totalorder %s106, %s108
      %p112 = scmp.eq.s32.totalorder %s25, 0
      %p113 = por %p111, %p112
      %p114 = scmp.ne.s32.totalorder %s106, %s108
      %p115 = scmp.eq.s32.totalorder %s30, 1
      %p116 = por %p114, %p115
      %p117 = scmp.ne.s32.totalorder %s108, %s109
      %p118 = scmp.eq.s32.totalorder %s30, 0
      %p119 = por %p117, %p118
      %p120 = scmp.ne.s32.totalorder %s108, %s109
      %p121 = scmp.eq.s32.totalorder %s31, 1
      %p122 = por %p120, %p121
      %p124 = scmp.ne.s32.totalorder %s109, %s123
      %p125 = scmp.eq.s32.totalorder %s31, 0
      %p126 = por %p124, %p125
      %s128 = sadd.s32 %s127, 1
      %p131 = scmp.eq.s32.totalorder %s25, 1
      %p132 = scmp.ne.s32.totalorder %s127, %s129
      %p133 = scmp.eq.s32.totalorder %s25, 0
      %p134 = por %p132, %p133
      %p135 = scmp.ne.s32.totalorder %s127, %s129
      %p136 = scmp.eq.s32.totalorder %s30, 1
      %p137 = por %p135, %p136
      %p138 = scmp.ne.s32.totalorder %s129, %s130
      %p139 = scmp.eq.s32.totalorder %s30, 0
      %p140 = por %p138, %p139
      %p141 = scmp.ne.s32.totalorder %s129, %s130
      %p142 = scmp.eq.s32.totalorder %s31, 1
      %p143 = por %p141, %p142
      %p145 = scmp.ne.s32.totalorder %s130, %s144
      %p146 = scmp.eq.s32.totalorder %s31, 0
      %p147 = por %p145, %p146
      %s149 = sadd.s32 %s148, 1
      %p152 = scmp.eq.s32.totalorder %s25, 1
      %p153 = scmp.ne.s32.totalorder %s148, %s150
      %p154 = scmp.eq.s32.totalorder %s25, 0
      %p155 = por %p153, %p154
      %p156 = scmp.ne.s32.totalorder %s148, %s150
      %p157 = scmp.eq.s32.totalorder %s30, 1
      %p158 = por %p156, %p157
      %p159 = scmp.ne.s32.totalorder %s150, %s151
      %p160 = scmp.eq.s32.totalorder %s30, 0
      %p161 = por %p159, %p160
      %p162 = scmp.ne.s32.totalorder %s150, %s151
      %p163 = scmp.eq.s32.totalorder %s31, 1
      %p164 = por %p162, %p163
      %p166 = scmp.ne.s32.totalorder %s151, %s165
      %p167 = scmp.eq.s32.totalorder %s31, 0
      %p168 = por %p166, %p167
      %s170 = sadd.s32 %s169, 1
      %p173 = scmp.eq.s32.totalorder %s25, 1
      %p174 = scmp.ne.s32.totalorder %s169, %s171
      %p175 = scmp.eq.s32.totalorder %s25, 0
      %p176 = por %p174, %p175
      %p177 = scmp.ne.s32.totalorder %s169, %s171
      %p178 = scmp.eq.s32.totalorder %s30, 1
      %p179 = por %p177, %p178
      %p180 = scmp.ne.s32.totalorder %s171, %s172
      %p181 = scmp.eq.s32.totalorder %s30, 0
      %p182 = por %p180, %p181
      %p183 = scmp.ne.s32.totalorder %s171, %s172
      %p184 = scmp.eq.s32.totalorder %s31, 1
      %p185 = por %p183, %p184
      %p187 = scmp.ne.s32.totalorder %s172, %s186
      %p188 = scmp.eq.s32.totalorder %s31, 0
      %p189 = por %p187, %p188
      %s191 = sadd.s32 %s190, 1
      %p194 = scmp.eq.s32.totalorder %s25, 1
      %p195 = scmp.ne.s32.totalorder %s190, %s192
      %p196 = scmp.eq.s32.totalorder %s25, 0
      %p197 = por %p195, %p196
      %p198 = scmp.ne.s32.totalorder %s190, %s192
      %p199 = scmp.eq.s32.totalorder %s30, 1
      %p200 = por %p198, %p199
      %p201 = scmp.ne.s32.totalorder %s192, %s193
      %p202 = scmp.eq.s32.totalorder %s30, 0
      %p203 = por %p201, %p202
      %p204 = scmp.ne.s32.totalorder %s192, %s193
      %p205 = scmp.eq.s32.totalorder %s31, 1
      %p206 = por %p204, %p205
      %p208 = scmp.ne.s32.totalorder %s193, %s207
      %p209 = scmp.eq.s32.totalorder %s31, 0
      %p210 = por %p208, %p209
      %s212 = sadd.s32 %s211, 1
      %p215 = scmp.eq.s32.totalorder %s25, 1
      %p216 = scmp.ne.s32.totalorder %s211, %s213
      %p217 = scmp.eq.s32.totalorder %s25, 0
      %p218 = por %p216, %p217
      %p219 = scmp.ne.s32.totalorder %s211, %s213
      %p220 = scmp.eq.s32.totalorder %s30, 1
      %p221 = por %p219, %p220
      %p222 = scmp.ne.s32.totalorder %s213, %s214
      %p223 = scmp.eq.s32.totalorder %s30, 0
      %p224 = por %p222, %p223
      %p225 = scmp.ne.s32.totalorder %s213, %s214
      %p226 = scmp.eq.s32.totalorder %s31, 1
      %p227 = por %p225, %p226
      %p229 = scmp.ne.s32.totalorder %s214, %s228
      %p230 = scmp.eq.s32.totalorder %s31, 0
      %p231 = por %p229, %p230
      %s233 = sadd.s32 %s232, 1
      %p236 = scmp.eq.s32.totalorder %s25, 1
      %p237 = scmp.ne.s32.totalorder %s232, %s234
      %p238 = scmp.eq.s32.totalorder %s25, 0
      %p239 = por %p237, %p238
      %p240 = scmp.ne.s32.totalorder %s232, %s234
      %p241 = scmp.eq.s32.totalorder %s30, 1
      %p242 = por %p240, %p241
      %p243 = scmp.ne.s32.totalorder %s234, %s235
      %p244 = scmp.eq.s32.totalorder %s30, 0
      %p245 = por %p243, %p244
      %p246 = scmp.ne.s32.totalorder %s234, %s235
      %p247 = scmp.eq.s32.totalorder %s31, 1
      %p248 = por %p246, %p247
      %p250 = scmp.ne.s32.totalorder %s235, %s249
      %p251 = scmp.eq.s32.totalorder %s31, 0
      %p252 = por %p250, %p251
      %s254 = sadd.s32 %s253, 1
      %p257 = scmp.eq.s32.totalorder %s25, 1
      %p258 = scmp.ne.s32.totalorder %s253, %s255
      %p259 = scmp.eq.s32.totalorder %s25, 0
      %p260 = por %p258, %p259
      %p261 = scmp.ne.s32.totalorder %s253, %s255
      %p262 = scmp.eq.s32.totalorder %s30, 1
      %p263 = por %p261, %p262
      %p264 = scmp.ne.s32.totalorder %s255, %s256
      %p265 = scmp.eq.s32.totalorder %s30, 0
      %p266 = por %p264, %p265
      %p267 = scmp.ne.s32.totalorder %s255, %s256
      %p268 = scmp.eq.s32.totalorder %s31, 1
      %p269 = por %p267, %p268
      %p271 = scmp.ne.s32.totalorder %s256, %s270
      %p272 = scmp.eq.s32.totalorder %s31, 0
      %p273 = por %p271, %p272
      %s275 = sadd.s32 %s274, 1
      %p278 = scmp.eq.s32.totalorder %s25, 1
      %p279 = scmp.ne.s32.totalorder %s274, %s276
      %p280 = scmp.eq.s32.totalorder %s25, 0
      %p281 = por %p279, %p280
      %p282 = scmp.ne.s32.totalorder %s274, %s276
      %p283 = scmp.eq.s32.totalorder %s30, 1
      %p284 = por %p282, %p283
      %p285 = scmp.ne.s32.totalorder %s276, %s277
      %p286 = scmp.eq.s32.totalorder %s30, 0
      %p287 = por %p285, %p286
      %p288 = scmp.ne.s32.totalorder %s276, %s277
      %p289 = scmp.eq.s32.totalorder %s31, 1
      %p290 = por %p288, %p289
      %p292 = scmp.ne.s32.totalorder %s277, %s291
      %p293 = scmp.eq.s32.totalorder %s31, 0
      %p294 = por %p292, %p293
      %s296 = sadd.s32 %s295, 1
      %p299 = scmp.eq.s32.totalorder %s25, 1
      %p300 = scmp.ne.s32.totalorder %s295, %s297
      %p301 = scmp.eq.s32.totalorder %s25, 0
      %p302 = por %p300, %p301
      %p303 = scmp.ne.s32.totalorder %s295, %s297
      %p304 = scmp.eq.s32.totalorder %s30, 1
      %p305 = por %p303, %p304
      %p306 = scmp.ne.s32.totalorder %s297, %s298
      %p307 = scmp.eq.s32.totalorder %s30, 0
      %p308 = por %p306, %p307
      %p309 = scmp.ne.s32.totalorder %s297, %s298
      %p310 = scmp.eq.s32.totalorder %s31, 1
      %p311 = por %p309, %p310
      %p313 = scmp.ne.s32.totalorder %s298, %s312
      %p314 = scmp.eq.s32.totalorder %s31, 0
      %p315 = por %p313, %p314
      %s317 = sadd.s32 %s316, 1
      %p320 = scmp.eq.s32.totalorder %s25, 1
      %p321 = scmp.ne.s32.totalorder %s316, %s318
      %p322 = scmp.eq.s32.totalorder %s25, 0
      %p323 = por %p321, %p322
      %p324 = scmp.ne.s32.totalorder %s316, %s318
      %p325 = scmp.eq.s32.totalorder %s30, 1
      %p326 = por %p324, %p325
      %p327 = scmp.ne.s32.totalorder %s318, %s319
      %p328 = scmp.eq.s32.totalorder %s30, 0
      %p329 = por %p327, %p328
      %p330 = scmp.ne.s32.totalorder %s318, %s319
      %p331 = scmp.eq.s32.totalorder %s31, 1
      %p332 = por %p330, %p331
      %p334 = scmp.ne.s32.totalorder %s319, %s333
      %p335 = scmp.eq.s32.totalorder %s31, 0
      %p336 = por %p334, %p335
      %s338 = sadd.s32 %s337, 1
      %p341 = scmp.eq.s32.totalorder %s25, 1
      %p342 = scmp.ne.s32.totalorder %s337, %s339
      %p343 = scmp.eq.s32.totalorder %s25, 0
      %p344 = por %p342, %p343
      %p345 = scmp.ne.s32.totalorder %s337, %s339
      %p346 = scmp.eq.s32.totalorder %s30, 1
      %p347 = por %p345, %p346
      %p348 = scmp.ne.s32.totalorder %s339, %s340
      %p349 = scmp.eq.s32.totalorder %s30, 0
      %p350 = por %p348, %p349
      %p351 = scmp.ne.s32.totalorder %s339, %s340
      %p352 = scmp.eq.s32.totalorder %s31, 1
      %p353 = por %p351, %p352
      %p355 = scmp.ne.s32.totalorder %s340, %s354
      %p356 = scmp.eq.s32.totalorder %s31, 0
      %p357 = por %p355, %p356
      %s359 = sadd.s32 %s358, 1
      %p362 = scmp.eq.s32.totalorder %s25, 1
      %p363 = scmp.ne.s32.totalorder %s358, %s360
      %p364 = scmp.eq.s32.totalorder %s25, 0
      %p365 = por %p363, %p364
      %p366 = scmp.ne.s32.totalorder %s358, %s360
      %p367 = scmp.eq.s32.totalorder %s30, 1
      %p368 = por %p366, %p367
      %p369 = scmp.ne.s32.totalorder %s360, %s361
      %p370 = scmp.eq.s32.totalorder %s30, 0
      %p371 = por %p369, %p370
      %p372 = scmp.ne.s32.totalorder %s360, %s361
      %p373 = scmp.eq.s32.totalorder %s31, 1
      %p374 = por %p372, %p373
      %p376 = scmp.ne.s32.totalorder %s361, %s375
      %p377 = scmp.eq.s32.totalorder %s31, 0
      %p378 = por %p376, %p377
      %s379 = ssub.s32 %s25, %s32
      %p380 = scmp.eq.s32.totalorder %s379, 0
      %s382 = sadd.s32 %s381, 1
      %s383 = scalar_select %p380, %s381, %s382
      %p386 = pneg %p380
      %p387 = scmp.eq.s32.totalorder %s25, 1
      %p388 = por %p386, %p387
      %p389 = scmp.ne.s32.totalorder %s381, %s384
      %p390 = scmp.eq.s32.totalorder %s25, 0
      %p391 = por %p389, %p390
      %p392 = scmp.ne.s32.totalorder %s381, %s384
      %p393 = scmp.eq.s32.totalorder %s30, 1
      %p394 = por %p392, %p393
      %p395 = scmp.ne.s32.totalorder %s384, %s385
      %p396 = scmp.eq.s32.totalorder %s30, 0
      %p397 = por %p395, %p396
      %p398 = scmp.ne.s32.totalorder %s384, %s385
      %p399 = scmp.eq.s32.totalorder %s31, 1
      %p400 = por %p398, %p399
      %p402 = scmp.ne.s32.totalorder %s385, %s401
      %p403 = scmp.eq.s32.totalorder %s31, 0
      %p404 = por %p402, %p403
      %p405 = scmp.le.s32.totalorder 1, %s25
      %p406 = scmp.lt.s32.totalorder %s25, 3
      %p407 = pnand %p405, %p406
      %p408 = pneg %p407
      // Predicated region
      $region9: #{tpu_custom_call.1} parent=5 // pred_check
        _
      $region10: #{tpu_custom_call.1} parent=5 // pred_check_branch
        %410 = sbr.rel (%p407) target = $region12
      $region11: #{tpu_custom_call.1} parent=5 // pred_region
        %s411 = ssub.s32 %s25, 1
        // Predicated region
        $region13: #{tpu_custom_call.1} parent=11 // pred_check
          %p412 = pneg %p98
        $region14: #{tpu_custom_call.1} parent=11 // pred_check_branch
          %414 = sbr.rel (%p412) target = $region16
        $region15: #{tpu_custom_call.1} parent=11 // pred_region
          _
        $region16: #{tpu_custom_call.1} parent=11 // pred_fallthru
          _
        // Predicated region
        $region17: #{tpu_custom_call.1} parent=11 // pred_check
          %p415 = pneg %p119
        $region18: #{tpu_custom_call.1} parent=11 // pred_check_branch
          %417 = sbr.rel (%p415) target = $region20
        $region19: #{tpu_custom_call.1} parent=11 // pred_region
          _
        $region20: #{tpu_custom_call.1} parent=11 // pred_fallthru
          _
        // Predicated region
        $region21: #{tpu_custom_call.1} parent=11 // pred_check
          %p418 = pneg %p140
        $region22: #{tpu_custom_call.1} parent=11 // pred_check_branch
          %420 = sbr.rel (%p418) target = $region24
        $region23: #{tpu_custom_call.1} parent=11 // pred_region
          _
        $region24: #{tpu_custom_call.1} parent=11 // pred_fallthru
          _
        // Predicated region
        $region25: #{tpu_custom_call.1} parent=11 // pred_check
          %p421 = pneg %p161
        $region26: #{tpu_custom_call.1} parent=11 // pred_check_branch
          %423 = sbr.rel (%p421) target = $region28
        $region27: #{tpu_custom_call.1} parent=11 // pred_region
          _
        $region28: #{tpu_custom_call.1} parent=11 // pred_fallthru
          _
        // Predicated region
        $region29: #{tpu_custom_call.1} parent=11 // pred_check
          %p424 = pneg %p182
        $region30: #{tpu_custom_call.1} parent=11 // pred_check_branch
          %426 = sbr.rel (%p424) target = $region32
        $region31: #{tpu_custom_call.1} parent=11 // pred_region
          _
        $region32: #{tpu_custom_call.1} parent=11 // pred_fallthru
          _
        // Predicated region
        $region33: #{tpu_custom_call.1} parent=11 // pred_check
          %p427 = pneg %p203
        $region34: #{tpu_custom_call.1} parent=11 // pred_check_branch
          %429 = sbr.rel (%p427) target = $region36
        $region35: #{tpu_custom_call.1} parent=11 // pred_region
          _
        $region36: #{tpu_custom_call.1} parent=11 // pred_fallthru
          _
        // Predicated region
        $region37: #{tpu_custom_call.1} parent=11 // pred_check
          %p430 = pneg %p224
        $region38: #{tpu_custom_call.1} parent=11 // pred_check_branch
          %432 = sbr.rel (%p430) target = $region40
        $region39: #{tpu_custom_call.1} parent=11 // pred_region
          _
        $region40: #{tpu_custom_call.1} parent=11 // pred_fallthru
          _
        // Predicated region
        $region41: #{tpu_custom_call.1} parent=11 // pred_check
          %p433 = pneg %p245
        $region42: #{tpu_custom_call.1} parent=11 // pred_check_branch
          %435 = sbr.rel (%p433) target = $region44
        $region43: #{tpu_custom_call.1} parent=11 // pred_region
          _
        $region44: #{tpu_custom_call.1} parent=11 // pred_fallthru
          _
        // Predicated region
        $region45: #{tpu_custom_call.1} parent=11 // pred_check
          %p436 = pneg %p266
        $region46: #{tpu_custom_call.1} parent=11 // pred_check_branch
          %438 = sbr.rel (%p436) target = $region48
        $region47: #{tpu_custom_call.1} parent=11 // pred_region
          _
        $region48: #{tpu_custom_call.1} parent=11 // pred_fallthru
          _
        // Predicated region
        $region49: #{tpu_custom_call.1} parent=11 // pred_check
          %p439 = pneg %p287
        $region50: #{tpu_custom_call.1} parent=11 // pred_check_branch
          %441 = sbr.rel (%p439) target = $region52
        $region51: #{tpu_custom_call.1} parent=11 // pred_region
          _
        $region52: #{tpu_custom_call.1} parent=11 // pred_fallthru
          _
        // Predicated region
        $region53: #{tpu_custom_call.1} parent=11 // pred_check
          %p442 = pneg %p308
        $region54: #{tpu_custom_call.1} parent=11 // pred_check_branch
          %444 = sbr.rel (%p442) target = $region56
        $region55: #{tpu_custom_call.1} parent=11 // pred_region
          _
        $region56: #{tpu_custom_call.1} parent=11 // pred_fallthru
          _
        // Predicated region
        $region57: #{tpu_custom_call.1} parent=11 // pred_check
          %p445 = pneg %p329
        $region58: #{tpu_custom_call.1} parent=11 // pred_check_branch
          %447 = sbr.rel (%p445) target = $region60
        $region59: #{tpu_custom_call.1} parent=11 // pred_region
          _
        $region60: #{tpu_custom_call.1} parent=11 // pred_fallthru
          _
        // Predicated region
        $region61: #{tpu_custom_call.1} parent=11 // pred_check
          %p448 = pneg %p350
        $region62: #{tpu_custom_call.1} parent=11 // pred_check_branch
          %450 = sbr.rel (%p448) target = $region64
        $region63: #{tpu_custom_call.1} parent=11 // pred_region
          _
        $region64: #{tpu_custom_call.1} parent=11 // pred_fallthru
          _
        // Predicated region
        $region65: #{tpu_custom_call.1} parent=11 // pred_check
          %p451 = pneg %p371
        $region66: #{tpu_custom_call.1} parent=11 // pred_check_branch
          %453 = sbr.rel (%p451) target = $region68
        $region67: #{tpu_custom_call.1} parent=11 // pred_region
          _
        $region68: #{tpu_custom_call.1} parent=11 // pred_fallthru
          _
      $region12: #{tpu_custom_call.1} parent=5 // pred_fallthru
        _
      %p454 = scmp.lt.s32.totalorder %s25, 2
      // Predicated region
      $region69: #{tpu_custom_call.1} parent=5 // pred_check
        %p455 = pneg %p454
      $region70: #{tpu_custom_call.1} parent=5 // pred_check_branch
        %457 = sbr.rel (%p455) target = $region72
      $region71: #{tpu_custom_call.1} parent=5 // pred_region
        // Predicated region
        $region73: #{tpu_custom_call.1} parent=71 // pred_check
          %p458 = pneg %p45
        $region74: #{tpu_custom_call.1} parent=71 // pred_check_branch
          %460 = sbr.rel (%p458) target = $region76
        $region75: #{tpu_custom_call.1} parent=71 // pred_region
          %s461 = smul.u32 16, %s25
          %p462 = scmp.lt.s32.totalorder %s461, 31
          %s463 = scalar_select %p462, %s461, 31
          %s464 = smul.addr %s463, 8
          %s465 = scalar_lea.vmem %s0, %s464
          %s466 = smul.u32 16, %s25
        $region76: #{tpu_custom_call.1} parent=71 // pred_fallthru
          _
        // Predicated region
        $region77: #{tpu_custom_call.1} parent=71 // pred_check
          %p467 = pneg %p71
        $region78: #{tpu_custom_call.1} parent=71 // pred_check_branch
          %469 = sbr.rel (%p467) target = $region80
        $region79: #{tpu_custom_call.1} parent=71 // pred_region
          %s470 = sand.u32 %s61, 1
          %s471 = sand.u32 %s61, 1
          %s472 = smul.addr %s471, 256
          %s473 = scalar_lea.vmem [#allocation2], %s472
          %s474 = smul.u32 16, %s25
          %s475 = smul.addr %s474, 8
          %s476 = scalar_lea.vmem %s1, %s475
          // Predicated region
          $region81: #{tpu_custom_call.1} parent=79 // pred_check
            _
          $region82: #{tpu_custom_call.1} parent=79 // pred_check_branch
            %478 = sbr.rel (0) target = $region84
          $region83: #{tpu_custom_call.1} parent=79 // pred_region
            // Predicated region
            $region85: #{tpu_custom_call.1} parent=83 // pred_check
              _
            $region86: #{tpu_custom_call.1} parent=83 // pred_check_branch
              %480 = sbr.rel (0) target = $region88
            $region87: #{tpu_custom_call.1} parent=83 // pred_region
              // Predicated region
              $region100: #{tpu_custom_call.1} parent=87 // pred_check
                _
              $region101: #{tpu_custom_call.1} parent=87 // pred_check_branch
                %557 = sbr.rel (0) target = $region103
              $region102: #{tpu_custom_call.1} parent=87 // pred_region
                loop: start=0, step=1, limit=1
                $region104: #{tpu_custom_call.1} parent=102 // loop_pre_header
                  _
                $region105: #{tpu_custom_call.1} parent=102 // loop_header
                  %s559 = sphi 0, %s563
                  %p560 = scmp.ge.s32.totalorder %s559, 1
                  %s564 = sphi %s476, %s476
                  %s565 = sphi %s473, %s473
                $region106: #{tpu_custom_call.1} parent=102 // loop_header_branch
                  %562 = sbr.rel (%p560) target = $region110
                $region107: #{tpu_custom_call.1} parent=102 // loop_body
                  %v566 = vld [vmem:[%s564] sm:$0xff]
                  %567 = vst [vmem:[%s565] sm:$0xff] %v566
                  %v568 = vld [vmem:[%s564 + $0x8] sm:$0xff]
                  %569 = vst [vmem:[%s565 + $0x8] sm:$0xff] %v568
                  %v570 = vld [vmem:[%s564 + $0x10] sm:$0xff]
                  %571 = vst [vmem:[%s565 + $0x10] sm:$0xff] %v570
                  %v572 = vld [vmem:[%s564 + $0x18] sm:$0xff]
                  %573 = vst [vmem:[%s565 + $0x18] sm:$0xff] %v572
                  %v574 = vld [vmem:[%s564 + $0x20] sm:$0xff]
                  %575 = vst [vmem:[%s565 + $0x20] sm:$0xff] %v574
                  %v576 = vld [vmem:[%s564 + $0x28] sm:$0xff]
                  %577 = vst [vmem:[%s565 + $0x28] sm:$0xff] %v576
                  %v578 = vld [vmem:[%s564 + $0x30] sm:$0xff]
                  %579 = vst [vmem:[%s565 + $0x30] sm:$0xff] %v578
                  %v580 = vld [vmem:[%s564 + $0x38] sm:$0xff]
                  %581 = vst [vmem:[%s565 + $0x38] sm:$0xff] %v580
                  %v582 = vld [vmem:[%s564 + $0x40] sm:$0xff]
                  %583 = vst [vmem:[%s565 + $0x40] sm:$0xff] %v582
                  %v584 = vld [vmem:[%s564 + $0x48] sm:$0xff]
                  %585 = vst [vmem:[%s565 + $0x48] sm:$0xff] %v584
                  %v586 = vld [vmem:[%s564 + $0x50] sm:$0xff]
                  %587 = vst [vmem:[%s565 + $0x50] sm:$0xff] %v586
                  %v588 = vld [vmem:[%s564 + $0x58] sm:$0xff]
                  %589 = vst [vmem:[%s565 + $0x58] sm:$0xff] %v588
                  %v590 = vld [vmem:[%s564 + $0x60] sm:$0xff]
                  %591 = vst [vmem:[%s565 + $0x60] sm:$0xff] %v590
                  %v592 = vld [vmem:[%s564 + $0x68] sm:$0xff]
                  %593 = vst [vmem:[%s565 + $0x68] sm:$0xff] %v592
                  %v594 = vld [vmem:[%s564 + $0x70] sm:$0xff]
                  %595 = vst [vmem:[%s565 + $0x70] sm:$0xff] %v594
                  %v596 = vld [vmem:[%s564 + $0x78] sm:$0xff]
                  %597 = vst [vmem:[%s565 + $0x78] sm:$0xff] %v596
                  %v598 = vld [vmem:[%s564 + $0x100] sm:$0xff]
                  %599 = vst [vmem:[%s565 + $0x80] sm:$0xff] %v598
                  %v600 = vld [vmem:[%s564 + $0x108] sm:$0xff]
                  %601 = vst [vmem:[%s565 + $0x88] sm:$0xff] %v600
                  %v602 = vld [vmem:[%s564 + $0x110] sm:$0xff]
                  %603 = vst [vmem:[%s565 + $0x90] sm:$0xff] %v602
                  %v604 = vld [vmem:[%s564 + $0x118] sm:$0xff]
                  %605 = vst [vmem:[%s565 + $0x98] sm:$0xff] %v604
                  %v606 = vld [vmem:[%s564 + $0x120] sm:$0xff]
                  %607 = vst [vmem:[%s565 + $0xa0] sm:$0xff] %v606
                  %v608 = vld [vmem:[%s564 + $0x128] sm:$0xff]
                  %609 = vst [vmem:[%s565 + $0xa8] sm:$0xff] %v608
                  %v610 = vld [vmem:[%s564 + $0x130] sm:$0xff]
                  %611 = vst [vmem:[%s565 + $0xb0] sm:$0xff] %v610
                  %v612 = vld [vmem:[%s564 + $0x138] sm:$0xff]
                  %613 = vst [vmem:[%s565 + $0xb8] sm:$0xff] %v612
                  %v614 = vld [vmem:[%s564 + $0x140] sm:$0xff]
                  %615 = vst [vmem:[%s565 + $0xc0] sm:$0xff] %v614
                  %v616 = vld [vmem:[%s564 + $0x148] sm:$0xff]
                  %617 = vst [vmem:[%s565 + $0xc8] sm:$0xff] %v616
                  %v618 = vld [vmem:[%s564 + $0x150] sm:$0xff]
                  %619 = vst [vmem:[%s565 + $0xd0] sm:$0xff] %v618
                  %v620 = vld [vmem:[%s564 + $0x158] sm:$0xff]
                  %621 = vst [vmem:[%s565 + $0xd8] sm:$0xff] %v620
                  %v622 = vld [vmem:[%s564 + $0x160] sm:$0xff]
                  %623 = vst [vmem:[%s565 + $0xe0] sm:$0xff] %v622
                  %v624 = vld [vmem:[%s564 + $0x168] sm:$0xff]
                  %625 = vst [vmem:[%s565 + $0xe8] sm:$0xff] %v624
                  %v626 = vld [vmem:[%s564 + $0x170] sm:$0xff]
                  %627 = vst [vmem:[%s565 + $0xf0] sm:$0xff] %v626
                  %v628 = vld [vmem:[%s564 + $0x178] sm:$0xff]
                  %629 = vst [vmem:[%s565 + $0xf8] sm:$0xff] %v628
                $region108: #{tpu_custom_call.1} parent=102 // loop_footer
                  %s563 = sadd.s32 1, %s559
                $region109: #{tpu_custom_call.1} parent=102 // loop_footer_branch
                  %558 = sbr.rel target = $region105
                $region110: #{tpu_custom_call.1} parent=102 // loop_exit
                  _
              $region103: #{tpu_custom_call.1} parent=87 // pred_fallthru
                _
              // Predicated region
              $region111: #{tpu_custom_call.1} parent=87 // pred_check
                _
              $region112: #{tpu_custom_call.1} parent=87 // pred_check_branch
                %631 = sbr.rel target = $region114
              $region113: #{tpu_custom_call.1} parent=87 // pred_region
                _
              $region114: #{tpu_custom_call.1} parent=87 // pred_fallthru
                _
            $region88: #{tpu_custom_call.1} parent=83 // pred_fallthru
              _
            // Predicated region
            $region89: #{tpu_custom_call.1} parent=83 // pred_check
              _
            $region90: #{tpu_custom_call.1} parent=83 // pred_check_branch
              %482 = sbr.rel target = $region92
            $region91: #{tpu_custom_call.1} parent=83 // pred_region
              loop: start=0, step=1, limit=1
              $region93: #{tpu_custom_call.1} parent=91 // loop_pre_header
                _
              $region94: #{tpu_custom_call.1} parent=91 // loop_header
                %s485 = sphi 0, %s489
                %p486 = scmp.ge.s32.totalorder %s485, 1
                %s490 = sphi %s476, %s476
                %s491 = sphi %s473, %s473
              $region95: #{tpu_custom_call.1} parent=91 // loop_header_branch
                %488 = sbr.rel (%p486) target = $region99
              $region96: #{tpu_custom_call.1} parent=91 // loop_body
                %v492 = vld [vmem:[%s490] sm:$0xff]
                %493 = vst [vmem:[%s491] sm:$0xff] %v492
                %v494 = vld [vmem:[%s490 + $0x8] sm:$0xff]
                %495 = vst [vmem:[%s491 + $0x8] sm:$0xff] %v494
                %v496 = vld [vmem:[%s490 + $0x10] sm:$0xff]
                %497 = vst [vmem:[%s491 + $0x10] sm:$0xff] %v496
                %v498 = vld [vmem:[%s490 + $0x18] sm:$0xff]
                %499 = vst [vmem:[%s491 + $0x18] sm:$0xff] %v498
                %v500 = vld [vmem:[%s490 + $0x20] sm:$0xff]
                %501 = vst [vmem:[%s491 + $0x20] sm:$0xff] %v500
                %v502 = vld [vmem:[%s490 + $0x28] sm:$0xff]
                %503 = vst [vmem:[%s491 + $0x28] sm:$0xff] %v502
                %v504 = vld [vmem:[%s490 + $0x30] sm:$0xff]
                %505 = vst [vmem:[%s491 + $0x30] sm:$0xff] %v504
                %v506 = vld [vmem:[%s490 + $0x38] sm:$0xff]
                %507 = vst [vmem:[%s491 + $0x38] sm:$0xff] %v506
                %v508 = vld [vmem:[%s490 + $0x40] sm:$0xff]
                %509 = vst [vmem:[%s491 + $0x40] sm:$0xff] %v508
                %v510 = vld [vmem:[%s490 + $0x48] sm:$0xff]
                %511 = vst [vmem:[%s491 + $0x48] sm:$0xff] %v510
                %v512 = vld [vmem:[%s490 + $0x50] sm:$0xff]
                %513 = vst [vmem:[%s491 + $0x50] sm:$0xff] %v512
                %v514 = vld [vmem:[%s490 + $0x58] sm:$0xff]
                %515 = vst [vmem:[%s491 + $0x58] sm:$0xff] %v514
                %v516 = vld [vmem:[%s490 + $0x60] sm:$0xff]
                %517 = vst [vmem:[%s491 + $0x60] sm:$0xff] %v516
                %v518 = vld [vmem:[%s490 + $0x68] sm:$0xff]
                %519 = vst [vmem:[%s491 + $0x68] sm:$0xff] %v518
                %v520 = vld [vmem:[%s490 + $0x70] sm:$0xff]
                %521 = vst [vmem:[%s491 + $0x70] sm:$0xff] %v520
                %v522 = vld [vmem:[%s490 + $0x78] sm:$0xff]
                %523 = vst [vmem:[%s491 + $0x78] sm:$0xff] %v522
                %v524 = vld [vmem:[%s490 + $0x100] sm:$0xff]
                %525 = vst [vmem:[%s491 + $0x80] sm:$0xff] %v524
                %v526 = vld [vmem:[%s490 + $0x108] sm:$0xff]
                %527 = vst [vmem:[%s491 + $0x88] sm:$0xff] %v526
                %v528 = vld [vmem:[%s490 + $0x110] sm:$0xff]
                %529 = vst [vmem:[%s491 + $0x90] sm:$0xff] %v528
                %v530 = vld [vmem:[%s490 + $0x118] sm:$0xff]
                %531 = vst [vmem:[%s491 + $0x98] sm:$0xff] %v530
                %v532 = vld [vmem:[%s490 + $0x120] sm:$0xff]
                %533 = vst [vmem:[%s491 + $0xa0] sm:$0xff] %v532
                %v534 = vld [vmem:[%s490 + $0x128] sm:$0xff]
                %535 = vst [vmem:[%s491 + $0xa8] sm:$0xff] %v534
                %v536 = vld [vmem:[%s490 + $0x130] sm:$0xff]
                %537 = vst [vmem:[%s491 + $0xb0] sm:$0xff] %v536
                %v538 = vld [vmem:[%s490 + $0x138] sm:$0xff]
                %539 = vst [vmem:[%s491 + $0xb8] sm:$0xff] %v538
                %v540 = vld [vmem:[%s490 + $0x140] sm:$0xff]
                %541 = vst [vmem:[%s491 + $0xc0] sm:$0xff] %v540
                %v542 = vld [vmem:[%s490 + $0x148] sm:$0xff]
                %543 = vst [vmem:[%s491 + $0xc8] sm:$0xff] %v542
                %v544 = vld [vmem:[%s490 + $0x150] sm:$0xff]
                %545 = vst [vmem:[%s491 + $0xd0] sm:$0xff] %v544
                %v546 = vld [vmem:[%s490 + $0x158] sm:$0xff]
                %547 = vst [vmem:[%s491 + $0xd8] sm:$0xff] %v546
                %v548 = vld [vmem:[%s490 + $0x160] sm:$0xff]
                %549 = vst [vmem:[%s491 + $0xe0] sm:$0xff] %v548
                %v550 = vld [vmem:[%s490 + $0x168] sm:$0xff]
                %551 = vst [vmem:[%s491 + $0xe8] sm:$0xff] %v550
                %v552 = vld [vmem:[%s490 + $0x170] sm:$0xff]
                %553 = vst [vmem:[%s491 + $0xf0] sm:$0xff] %v552
                %v554 = vld [vmem:[%s490 + $0x178] sm:$0xff]
                %555 = vst [vmem:[%s491 + $0xf8] sm:$0xff] %v554
              $region97: #{tpu_custom_call.1} parent=91 // loop_footer
                %s489 = sadd.s32 1, %s485
              $region98: #{tpu_custom_call.1} parent=91 // loop_footer_branch
                %484 = sbr.rel target = $region94
              $region99: #{tpu_custom_call.1} parent=91 // loop_exit
                _
            $region92: #{tpu_custom_call.1} parent=83 // pred_fallthru
              _
          $region84: #{tpu_custom_call.1} parent=79 // pred_fallthru
            _
          %632 = vnop
        $region80: #{tpu_custom_call.1} parent=71 // pred_fallthru
          _
      $region72: #{tpu_custom_call.1} parent=5 // pred_fallthru
        _
      %p633 = scmp.le.s32.totalorder 1, %s25
      %p634 = scmp.lt.s32.totalorder %s25, 3
      %p635 = pnand %p633, %p634
      %p636 = pneg %p635
      // Predicated region
      $region115: #{tpu_custom_call.1} parent=5 // pred_check
        _
      $region116: #{tpu_custom_call.1} parent=5 // pred_check_branch
        %638 = sbr.rel (%p635) target = $region118
      $region117: #{tpu_custom_call.1} parent=5 // pred_region
        %s639 = ssub.s32 %s25, 1
        %s640 = sand.u32 %s64, 1
        %s641 = sand.u32 %s64, 1
        %s642 = smul.addr %s641, 256
        %s643 = scalar_lea.vmem [#allocation2], %s642
        // Predicated region
        $region119: #{tpu_custom_call.1} parent=117 // pred_check
          %p644 = pneg %p77
        $region120: #{tpu_custom_call.1} parent=117 // pred_check_branch
          %646 = sbr.rel (%p644) target = $region122
        $region121: #{tpu_custom_call.1} parent=117 // pred_region
          _
        $region122: #{tpu_custom_call.1} parent=117 // pred_fallthru
          _
        %s647 = smul.u32 16, %s30
        %p648 = scmp.lt.s32.totalorder %s647, 31
        %s649 = scalar_select %p648, %s647, 31
        %s650 = smul.addr %s649, 8
        %s651 = scalar_lea.vmem %s0, %s650
        %p652 = pneg %p51
        %p653 = pneg %p48
        %s654 = sand.u32 %s64, 1
        %s655 = sand.u32 %s64, 1
        %s656 = smul.addr %s655, 256
        %s657 = scalar_lea.vmem [#allocation2], %s656
        %p658 = pneg %p77
        %p659 = pneg %p74
        %p660 = pneg %p98
        %p661 = pneg %p95
        %p662 = pneg %p119
        %p663 = pneg %p116
        %p664 = pneg %p140
        %p665 = pneg %p137
        %p666 = pneg %p161
        %p667 = pneg %p158
        %p668 = pneg %p182
        %p669 = pneg %p179
        %p670 = pneg %p203
        %p671 = pneg %p200
        %p672 = pneg %p224
        %p673 = pneg %p221
        %p674 = pneg %p245
        %p675 = pneg %p242
        %p676 = pneg %p266
        %p677 = pneg %p263
        %p678 = pneg %p287
        %p679 = pneg %p284
        %p680 = pneg %p308
        %p681 = pneg %p305
        %p682 = pneg %p329
        %p683 = pneg %p326
        %p684 = pneg %p350
        %p685 = pneg %p347
        %p686 = pneg %p371
        %p687 = pneg %p368
        %p688 = pneg %p397
        %p689 = pneg %p394
        %s690 = sand.u32 %s384, 1
        %s691 = scalar_lea.sflag [#allocation4], %s690
        %s692 = sand.u32 %s384, 1
        %s693 = smul.addr %s692, 8
        %s694 = scalar_lea.vmem [#allocation3], %s693
        %s695 = smul.u32 16, %s30
        %p696 = scmp.lt.s32.totalorder %s695, 31
        %s697 = scalar_select %p696, %s695, 31
        %s698 = smul.addr %s697, 8
        %s699 = scalar_lea.vmem %s0, %s698
        %s700 = smul.u32 16, %s30
        %s701 = smul.u32 16, %s30
        %v703 = vld [vmem:[%s699] sm:$0xff]
        %v704 = vld [vmem:[%s699 + $0x8] sm:$0xff]
        %v705 = vld [vmem:[%s699 + $0x10] sm:$0xff]
        %v706 = vld [vmem:[%s699 + $0x18] sm:$0xff]
        %v707 = vld [vmem:[%s699 + $0x20] sm:$0xff]
        %v708 = vld [vmem:[%s699 + $0x28] sm:$0xff]
        %v709 = vld [vmem:[%s699 + $0x30] sm:$0xff]
        %v710 = vld [vmem:[%s699 + $0x38] sm:$0xff]
        %v711 = vld [vmem:[%s699 + $0x40] sm:$0xff]
        %v712 = vld [vmem:[%s699 + $0x48] sm:$0xff]
        %v713 = vld [vmem:[%s699 + $0x50] sm:$0xff]
        %v714 = vld [vmem:[%s699 + $0x58] sm:$0xff]
        %v715 = vld [vmem:[%s699 + $0x60] sm:$0xff]
        %v716 = vld [vmem:[%s699 + $0x68] sm:$0xff]
        %v717 = vld [vmem:[%s699 + $0x70] sm:$0xff]
        %v718 = vld [vmem:[%s699 + $0x78] sm:$0xff]
        %v719 = vld [vmem:[%s643] sm:$0xff]
        %v720 = vld [vmem:[%s643 + $0x8] sm:$0xff]
        %v721 = vld [vmem:[%s643 + $0x10] sm:$0xff]
        %v722 = vld [vmem:[%s643 + $0x18] sm:$0xff]
        %v723 = vld [vmem:[%s643 + $0x20] sm:$0xff]
        %v724 = vld [vmem:[%s643 + $0x28] sm:$0xff]
        %v725 = vld [vmem:[%s643 + $0x30] sm:$0xff]
        %v726 = vld [vmem:[%s643 + $0x38] sm:$0xff]
        %v727 = vld [vmem:[%s643 + $0x40] sm:$0xff]
        %v728 = vld [vmem:[%s643 + $0x48] sm:$0xff]
        %v729 = vld [vmem:[%s643 + $0x50] sm:$0xff]
        %v730 = vld [vmem:[%s643 + $0x58] sm:$0xff]
        %v731 = vld [vmem:[%s643 + $0x60] sm:$0xff]
        %v732 = vld [vmem:[%s643 + $0x68] sm:$0xff]
        %v733 = vld [vmem:[%s643 + $0x70] sm:$0xff]
        %v734 = vld [vmem:[%s643 + $0x78] sm:$0xff]
        %v735 = vld [vmem:[%s643 + $0x80] sm:$0xff]
        %v736 = vld [vmem:[%s643 + $0x88] sm:$0xff]
        %v737 = vld [vmem:[%s643 + $0x90] sm:$0xff]
        %v738 = vld [vmem:[%s643 + $0x98] sm:$0xff]
        %v739 = vld [vmem:[%s643 + $0xa0] sm:$0xff]
        %v740 = vld [vmem:[%s643 + $0xa8] sm:$0xff]
        %v741 = vld [vmem:[%s643 + $0xb0] sm:$0xff]
        %v742 = vld [vmem:[%s643 + $0xb8] sm:$0xff]
        %v743 = vld [vmem:[%s643 + $0xc0] sm:$0xff]
        %v744 = vld [vmem:[%s643 + $0xc8] sm:$0xff]
        %v745 = vld [vmem:[%s643 + $0xd0] sm:$0xff]
        %v746 = vld [vmem:[%s643 + $0xd8] sm:$0xff]
        %v747 = vld [vmem:[%s643 + $0xe0] sm:$0xff]
        %v748 = vld [vmem:[%s643 + $0xe8] sm:$0xff]
        %v749 = vld [vmem:[%s643 + $0xf0] sm:$0xff]
        %v750 = vld [vmem:[%s643 + $0xf8] sm:$0xff]
        %v751 = vpack.c.bf16 %v720, %v719
        %v752 = vpack.c.bf16 %v722, %v721
        %v753 = vpack.c.bf16 %v724, %v723
        %v754 = vpack.c.bf16 %v726, %v725
        %v755 = vpack.c.bf16 %v728, %v727
        %v756 = vpack.c.bf16 %v730, %v729
        %v757 = vpack.c.bf16 %v732, %v731
        %v758 = vpack.c.bf16 %v734, %v733
        %v759 = vpack.c.bf16 %v736, %v735
        %v760 = vpack.c.bf16 %v738, %v737
        %v761 = vpack.c.bf16 %v740, %v739
        %v762 = vpack.c.bf16 %v742, %v741
        %v763 = vpack.c.bf16 %v744, %v743
        %v764 = vpack.c.bf16 %v746, %v745
        %v765 = vpack.c.bf16 %v748, %v747
        %v766 = vpack.c.bf16 %v750, %v749
        %v767 = vld [vmem:[%s2] sm:$0xf]
        %v768 = vld [vmem:[%s2 + $0x4] sm:$0xf]
        %v769 = vld [vmem:[%s3] sm:$0x1]
        %v771 = vlaneseq
        %v772 = vshrl.u32 %v771, 7
        %v773 = vsub.s32 0, %v772
        %v774 = vrot.slane %v769, %v773
        %v778 = vunpack.c.l.b16 %v767
        %v779 = vunpack.c.l.b16 %v768
        %v780 = vpack.c.b16 %v779, %v778
        %vm782 = vcmask 130048
        %v784 = vsel %vm782, %v751, 0
        %v787 = vsel %vm782, %v752, 0
        %v790 = vsel %vm782, %v753, 0
        %v793 = vsel %vm782, %v754, 0
        %v796 = vsel %vm782, %v755, 0
        %v799 = vsel %vm782, %v756, 0
        %v802 = vsel %vm782, %v757, 0
        %v805 = vsel %vm782, %v758, 0
        %v808 = vsel %vm782, %v759, 0
        %v811 = vsel %vm782, %v760, 0
        %v814 = vsel %vm782, %v761, 0
        %v817 = vsel %vm782, %v762, 0
        %v820 = vsel %vm782, %v763, 0
        %v823 = vsel %vm782, %v764, 0
        %v826 = vsel %vm782, %v765, 0
        %v829 = vsel %vm782, %v766, 0
        %831 = vmatprep.subr.bf16.mxu0 0
        %832 = vmatpush1.bf16.msra.mxu0 %v780
        %833 = vmatprep.subr.bf16.mxu0 0
        %834 = vmatpush1.bf16.msra.mxu0 0
        %835 = vmatprep.subr.bf16.mxu0 0
        %836 = vmatpush1.bf16.msra.mxu0 0
        %837 = vmatprep.subr.bf16.mxu0 0
        %838 = vmatpush1.bf16.msra.mxu0 0
        %839 = vmatprep.subr.bf16.mxu0 0
        %840 = vmatpush1.bf16.msra.mxu0 0
        %841 = vmatprep.subr.bf16.mxu0 0
        %842 = vmatpush1.bf16.msra.mxu0 0
        %843 = vmatprep.subr.bf16.mxu0 0
        %844 = vmatpush1.bf16.msra.mxu0 0
        %845 = vmatprep.subr.bf16.mxu0 0
        %846 = vmatpush1.bf16.msra.mxu0 0
        %847 = vmatprep.subr.bf16.mxu0 0
        %848 = vmatpush1.bf16.msra.mxu0 0
        %849 = vmatprep.subr.bf16.mxu0 0
        %850 = vmatpush1.bf16.msra.mxu0 0
        %851 = vmatprep.subr.bf16.mxu0 0
        %852 = vmatpush1.bf16.msra.mxu0 0
        %853 = vmatprep.subr.bf16.mxu0 0
        %854 = vmatpush1.bf16.msra.mxu0 0
        %855 = vmatprep.subr.bf16.mxu0 0
        %856 = vmatpush1.bf16.msra.mxu0 0
        %857 = vmatprep.subr.bf16.mxu0 0
        %858 = vmatpush1.bf16.msra.mxu0 0
        %859 = vmatprep.subr.bf16.mxu0 0
        %860 = vmatpush1.bf16.msra.mxu0 0
        %861 = vmatprep.subr.bf16.mxu0 0
        %862 = vmatpush1.bf16.msra.mxu0 0
        %863 = vmatprep.mubr.bf16.mxu0 0
        %864 = vmatmul.mubr.bf16.gmra.mrb[0].mxu0 %v784
        %v865 = vpop.f32.mrb[0].mxu0
        %v866 = vadd.f32 %v774, %v865
        %v867 = vpop.f32.mrb[0].mxu0
        %v868 = vpop.f32.mrb[0].mxu0
        %v869 = vadd.f32 %v774, %v868
        %v870 = vpop.f32.mrb[0].mxu0
        %871 = vmatprep.mubr.bf16.mxu0 0
        %872 = vmatmul.mubr.bf16.gmra.mrb[0].mxu0 %v787
        %v873 = vpop.f32.mrb[0].mxu0
        %v874 = vadd.f32 %v774, %v873
        %v875 = vpop.f32.mrb[0].mxu0
        %v876 = vpop.f32.mrb[0].mxu0
        %v877 = vadd.f32 %v774, %v876
        %v878 = vpop.f32.mrb[0].mxu0
        %879 = vmatprep.mubr.bf16.mxu0 0
        %880 = vmatmul.mubr.bf16.gmra.mrb[0].mxu0 %v790
        %v881 = vpop.f32.mrb[0].mxu0
        %v882 = vadd.f32 %v774, %v881
        %v883 = vpop.f32.mrb[0].mxu0
        %v884 = vpop.f32.mrb[0].mxu0
        %v885 = vadd.f32 %v774, %v884
        %v886 = vpop.f32.mrb[0].mxu0
        %887 = vmatprep.mubr.bf16.mxu0 0
        %888 = vmatmul.mubr.bf16.gmra.mrb[0].mxu0 %v793
        %v889 = vpop.f32.mrb[0].mxu0
        %v890 = vadd.f32 %v774, %v889
        %v891 = vpop.f32.mrb[0].mxu0
        %v892 = vpop.f32.mrb[0].mxu0
        %v893 = vadd.f32 %v774, %v892
        %v894 = vpop.f32.mrb[0].mxu0
        %895 = vmatprep.mubr.bf16.mxu0 0
        %896 = vmatmul.mubr.bf16.gmra.mrb[0].mxu0 %v796
        %v897 = vpop.f32.mrb[0].mxu0
        %v898 = vadd.f32 %v774, %v897
        %v899 = vpop.f32.mrb[0].mxu0
        %v900 = vpop.f32.mrb[0].mxu0
        %v901 = vadd.f32 %v774, %v900
        %v902 = vpop.f32.mrb[0].mxu0
        %903 = vmatprep.mubr.bf16.mxu0 0
        %904 = vmatmul.mubr.bf16.gmra.mrb[0].mxu0 %v799
        %v905 = vpop.f32.mrb[0].mxu0
        %v906 = vadd.f32 %v774, %v905
        %v907 = vpop.f32.mrb[0].mxu0
        %v908 = vpop.f32.mrb[0].mxu0
        %v909 = vadd.f32 %v774, %v908
        %v910 = vpop.f32.mrb[0].mxu0
        %911 = vmatprep.mubr.bf16.mxu0 0
        %912 = vmatmul.mubr.bf16.gmra.mrb[0].mxu0 %v802
        %v913 = vpop.f32.mrb[0].mxu0
        %v914 = vadd.f32 %v774, %v913
        %v915 = vpop.f32.mrb[0].mxu0
        %v916 = vpop.f32.mrb[0].mxu0
        %v917 = vadd.f32 %v774, %v916
        %v918 = vpop.f32.mrb[0].mxu0
        %919 = vmatprep.mubr.bf16.mxu0 0
        %920 = vmatmul.mubr.bf16.gmra.mrb[0].mxu0 %v805
        %v921 = vpop.f32.mrb[0].mxu0
        %v922 = vadd.f32 %v774, %v921
        %v923 = vpop.f32.mrb[0].mxu0
        %v924 = vpop.f32.mrb[0].mxu0
        %v925 = vadd.f32 %v774, %v924
        %v926 = vpop.f32.mrb[0].mxu0
        %927 = vmatprep.mubr.bf16.mxu0 0
        %928 = vmatmul.mubr.bf16.gmra.mrb[0].mxu0 %v808
        %v929 = vpop.f32.mrb[0].mxu0
        %v930 = vadd.f32 %v774, %v929
        %v931 = vpop.f32.mrb[0].mxu0
        %v932 = vpop.f32.mrb[0].mxu0
        %v933 = vadd.f32 %v774, %v932
        %v934 = vpop.f32.mrb[0].mxu0
        %935 = vmatprep.mubr.bf16.mxu0 0
        %936 = vmatmul.mubr.bf16.gmra.mrb[0].mxu0 %v811
        %v937 = vpop.f32.mrb[0].mxu0
        %v938 = vadd.f32 %v774, %v937
        %v939 = vpop.f32.mrb[0].mxu0
        %v940 = vpop.f32.mrb[0].mxu0
        %v941 = vadd.f32 %v774, %v940
        %v942 = vpop.f32.mrb[0].mxu0
        %943 = vmatprep.mubr.bf16.mxu0 0
        %944 = vmatmul.mubr.bf16.gmra.mrb[0].mxu0 %v814
        %v945 = vpop.f32.mrb[0].mxu0
        %v946 = vadd.f32 %v774, %v945
        %v947 = vpop.f32.mrb[0].mxu0
        %v948 = vpop.f32.mrb[0].mxu0
        %v949 = vadd.f32 %v774, %v948
        %v950 = vpop.f32.mrb[0].mxu0
        %951 = vmatprep.mubr.bf16.mxu0 0
        %952 = vmatmul.mubr.bf16.gmra.mrb[0].mxu0 %v817
        %v953 = vpop.f32.mrb[0].mxu0
        %v954 = vadd.f32 %v774, %v953
        %v955 = vpop.f32.mrb[0].mxu0
        %v956 = vpop.f32.mrb[0].mxu0
        %v957 = vadd.f32 %v774, %v956
        %v958 = vpop.f32.mrb[0].mxu0
        %959 = vmatprep.mubr.bf16.mxu0 0
        %960 = vmatmul.mubr.bf16.gmra.mrb[0].mxu0 %v820
        %v961 = vpop.f32.mrb[0].mxu0
        %v962 = vadd.f32 %v774, %v961
        %v963 = vpop.f32.mrb[0].mxu0
        %v964 = vpop.f32.mrb[0].mxu0
        %v965 = vadd.f32 %v774, %v964
        %v966 = vpop.f32.mrb[0].mxu0
        %967 = vmatprep.mubr.bf16.mxu0 0
        %968 = vmatmul.mubr.bf16.gmra.mrb[0].mxu0 %v823
        %v969 = vpop.f32.mrb[0].mxu0
        %v970 = vadd.f32 %v774, %v969
        %v971 = vpop.f32.mrb[0].mxu0
        %v972 = vpop.f32.mrb[0].mxu0
        %v973 = vadd.f32 %v774, %v972
        %v974 = vpop.f32.mrb[0].mxu0
        %975 = vmatprep.mubr.bf16.mxu0 0
        %976 = vmatmul.mubr.bf16.gmra.mrb[0].mxu0 %v826
        %v977 = vpop.f32.mrb[0].mxu0
        %v978 = vadd.f32 %v774, %v977
        %v979 = vpop.f32.mrb[0].mxu0
        %v980 = vpop.f32.mrb[0].mxu0
        %v981 = vadd.f32 %v774, %v980
        %v982 = vpop.f32.mrb[0].mxu0
        %983 = vmatprep.mubr.bf16.mxu0 0
        %984 = vmatmul.mubr.bf16.gmra.mrb[0].mxu0 %v829
        %v985 = vpop.f32.mrb[0].mxu0
        %v986 = vadd.f32 %v774, %v985
        %v987 = vpop.f32.mrb[0].mxu0
        %v988 = vpop.f32.mrb[0].mxu0
        %v989 = vadd.f32 %v774, %v988
        %v990 = vpop.f32.mrb[0].mxu0
        %991 = vdwg.mxu0
        %v992 = vmax.f32 %v866, 0.0
        %v993 = vmax.f32 %v869, 0.0
        %v994 = vmax.f32 %v874, 0.0
        %v995 = vmax.f32 %v877, 0.0
        %v996 = vmax.f32 %v882, 0.0
        %v997 = vmax.f32 %v885, 0.0
        %v998 = vmax.f32 %v890, 0.0
        %v999 = vmax.f32 %v893, 0.0
        %v1000 = vmax.f32 %v898, 0.0
        %v1001 = vmax.f32 %v901, 0.0
        %v1002 = vmax.f32 %v906, 0.0
        %v1003 = vmax.f32 %v909, 0.0
        %v1004 = vmax.f32 %v914, 0.0
        %v1005 = vmax.f32 %v917, 0.0
        %v1006 = vmax.f32 %v922, 0.0
        %v1007 = vmax.f32 %v925, 0.0
        %v1008 = vmax.f32 %v930, 0.0
        %v1009 = vmax.f32 %v933, 0.0
        %v1010 = vmax.f32 %v938, 0.0
        %v1011 = vmax.f32 %v941, 0.0
        %v1012 = vmax.f32 %v946, 0.0
        %v1013 = vmax.f32 %v949, 0.0
        %v1014 = vmax.f32 %v954, 0.0
        %v1015 = vmax.f32 %v957, 0.0
        %v1016 = vmax.f32 %v962, 0.0
        %v1017 = vmax.f32 %v965, 0.0
        %v1018 = vmax.f32 %v970, 0.0
        %v1019 = vmax.f32 %v973, 0.0
        %v1020 = vmax.f32 %v978, 0.0
        %v1021 = vmax.f32 %v981, 0.0
        %v1022 = vmax.f32 %v986, 0.0
        %v1023 = vmax.f32 %v989, 0.0
        %v1024 = vpack.c.bf16 %v993, %v992
        %v1025 = vpack.c.bf16 %v995, %v994
        %v1026 = vpack.c.bf16 %v997, %v996
        %v1027 = vpack.c.bf16 %v999, %v998
        %v1028 = vpack.c.bf16 %v1001, %v1000
        %v1029 = vpack.c.bf16 %v1003, %v1002
        %v1030 = vpack.c.bf16 %v1005, %v1004
        %v1031 = vpack.c.bf16 %v1007, %v1006
        %v1032 = vpack.c.bf16 %v1009, %v1008
        %v1033 = vpack.c.bf16 %v1011, %v1010
        %v1034 = vpack.c.bf16 %v1013, %v1012
        %v1035 = vpack.c.bf16 %v1015, %v1014
        %v1036 = vpack.c.bf16 %v1017, %v1016
        %v1037 = vpack.c.bf16 %v1019, %v1018
        %v1038 = vpack.c.bf16 %v1021, %v1020
        %v1039 = vpack.c.bf16 %v1023, %v1022
        %v1040 = vld [vmem:[%s4] sm:$0xf]
        %v1041 = vld [vmem:[%s4 + $0x4] sm:$0xf]
        %v1042 = vld [vmem:[%s4 + $0x8] sm:$0xf]
        %v1043 = vld [vmem:[%s4 + $0xc] sm:$0xf]
        %v1044 = vld [vmem:[%s4 + $0x10] sm:$0xf]
        %v1045 = vld [vmem:[%s4 + $0x14] sm:$0xf]
        %v1046 = vld [vmem:[%s4 + $0x18] sm:$0xf]
        %v1047 = vld [vmem:[%s4 + $0x1c] sm:$0xf]
        %v1048 = vld [vmem:[%s4 + $0x20] sm:$0xf]
        %v1049 = vld [vmem:[%s4 + $0x24] sm:$0xf]
        %v1050 = vld [vmem:[%s4 + $0x28] sm:$0xf]
        %v1051 = vld [vmem:[%s4 + $0x2c] sm:$0xf]
        %v1052 = vld [vmem:[%s4 + $0x30] sm:$0xf]
        %v1053 = vld [vmem:[%s4 + $0x34] sm:$0xf]
        %v1054 = vld [vmem:[%s4 + $0x38] sm:$0xf]
        %v1055 = vld [vmem:[%s4 + $0x3c] sm:$0xf]
        %v1056 = vld [vmem:[%s5] sm:$0x1]
        %v1058 = vlaneseq
        %v1059 = vshrl.u32 %v1058, 7
        %v1060 = vsub.s32 0, %v1059
        %v1061 = vrot.slane %v1056, %v1060
        %v1079 = vunpack.c.l.b16 %v1040
        %v1080 = vunpack.c.l.b16 %v1041
        %v1081 = vunpack.c.l.b16 %v1042
        %v1082 = vunpack.c.l.b16 %v1043
        %v1083 = vunpack.c.l.b16 %v1044
        %v1084 = vunpack.c.l.b16 %v1045
        %v1085 = vunpack.c.l.b16 %v1046
        %v1086 = vunpack.c.l.b16 %v1047
        %v1087 = vunpack.c.l.b16 %v1048
        %v1088 = vunpack.c.l.b16 %v1049
        %v1089 = vunpack.c.l.b16 %v1050
        %v1090 = vunpack.c.l.b16 %v1051
        %v1091 = vunpack.c.l.b16 %v1052
        %v1092 = vunpack.c.l.b16 %v1053
        %v1093 = vunpack.c.l.b16 %v1054
        %v1094 = vunpack.c.l.b16 %v1055
        %v1095 = vpack.c.b16 %v1080, %v1079
        %v1096 = vpack.c.b16 %v1082, %v1081
        %v1097 = vpack.c.b16 %v1084, %v1083
        %v1098 = vpack.c.b16 %v1086, %v1085
        %v1099 = vpack.c.b16 %v1088, %v1087
        %v1100 = vpack.c.b16 %v1090, %v1089
        %v1101 = vpack.c.b16 %v1092, %v1091
        %v1102 = vpack.c.b16 %v1094, %v1093
        %1111 = vmatprep.subr.bf16.mxu0 0
        %1112 = vmatpush1.bf16.msra.mxu0 %v1095
        %1113 = vmatprep.subr.bf16.mxu0 0
        %1114 = vmatpush1.bf16.msra.mxu0 %v1096
        %1115 = vmatprep.subr.bf16.mxu0 0
        %1116 = vmatpush1.bf16.msra.mxu0 %v1097
        %1117 = vmatprep.subr.bf16.mxu0 0
        %1118 = vmatpush1.bf16.msra.mxu0 %v1098
        %1119 = vmatprep.subr.bf16.mxu0 0
        %1120 = vmatpush1.bf16.msra.mxu0 %v1099
        %1121 = vmatprep.subr.bf16.mxu0 0
        %1122 = vmatpush1.bf16.msra.mxu0 %v1100
        %1123 = vmatprep.subr.bf16.mxu0 0
        %1124 = vmatpush1.bf16.msra.mxu0 %v1101
        %1125 = vmatprep.subr.bf16.mxu0 0
        %1126 = vmatpush1.bf16.msra.mxu0 %v1102
        %1127 = vmatprep.subr.bf16.mxu0 0
        %1128 = vmatpush1.bf16.msra.mxu0 0
        %1129 = vmatprep.subr.bf16.mxu0 0
        %1130 = vmatpush1.bf16.msra.mxu0 0
        %1131 = vmatprep.subr.bf16.mxu0 0
        %1132 = vmatpush1.bf16.msra.mxu0 0
        %1133 = vmatprep.subr.bf16.mxu0 0
        %1134 = vmatpush1.bf16.msra.mxu0 0
        %1135 = vmatprep.subr.bf16.mxu0 0
        %1136 = vmatpush1.bf16.msra.mxu0 0
        %1137 = vmatprep.subr.bf16.mxu0 0
        %1138 = vmatpush1.bf16.msra.mxu0 0
        %1139 = vmatprep.subr.bf16.mxu0 0
        %1140 = vmatpush1.bf16.msra.mxu0 0
        %1141 = vmatprep.subr.bf16.mxu0 0
        %1142 = vmatpush1.bf16.msra.mxu0 0
        %1143 = vmatprep.mubr.bf16.mxu0 0
        %1144 = vmatmul.mubr.bf16.gmra.mrb[0].mxu0 %v1024
        %v1145 = vpop.f32.mrb[0].mxu0
        %v1146 = vadd.f32 %v1061, %v1145
        %v1147 = vpop.f32.mrb[0].mxu0
        %v1148 = vpop.f32.mrb[0].mxu0
        %v1149 = vadd.f32 %v1061, %v1148
        %v1150 = vpop.f32.mrb[0].mxu0
        %1151 = vmatprep.mubr.bf16.mxu0 0
        %1152 = vmatmul.mubr.bf16.gmra.mrb[0].mxu0 %v1025
        %v1153 = vpop.f32.mrb[0].mxu0
        %v1154 = vadd.f32 %v1061, %v1153
        %v1155 = vpop.f32.mrb[0].mxu0
        %v1156 = vpop.f32.mrb[0].mxu0
        %v1157 = vadd.f32 %v1061, %v1156
        %v1158 = vpop.f32.mrb[0].mxu0
        %1159 = vmatprep.mubr.bf16.mxu0 0
        %1160 = vmatmul.mubr.bf16.gmra.mrb[0].mxu0 %v1026
        %v1161 = vpop.f32.mrb[0].mxu0
        %v1162 = vadd.f32 %v1061, %v1161
        %v1163 = vpop.f32.mrb[0].mxu0
        %v1164 = vpop.f32.mrb[0].mxu0
        %v1165 = vadd.f32 %v1061, %v1164
        %v1166 = vpop.f32.mrb[0].mxu0
        %1167 = vmatprep.mubr.bf16.mxu0 0
        %1168 = vmatmul.mubr.bf16.gmra.mrb[0].mxu0 %v1027
        %v1169 = vpop.f32.mrb[0].mxu0
        %v1170 = vadd.f32 %v1061, %v1169
        %v1171 = vpop.f32.mrb[0].mxu0
        %v1172 = vpop.f32.mrb[0].mxu0
        %v1173 = vadd.f32 %v1061, %v1172
        %v1174 = vpop.f32.mrb[0].mxu0
        %1175 = vmatprep.mubr.bf16.mxu0 0
        %1176 = vmatmul.mubr.bf16.gmra.mrb[0].mxu0 %v1028
        %v1177 = vpop.f32.mrb[0].mxu0
        %v1178 = vadd.f32 %v1061, %v1177
        %v1179 = vpop.f32.mrb[0].mxu0
        %v1180 = vpop.f32.mrb[0].mxu0
        %v1181 = vadd.f32 %v1061, %v1180
        %v1182 = vpop.f32.mrb[0].mxu0
        %1183 = vmatprep.mubr.bf16.mxu0 0
        %1184 = vmatmul.mubr.bf16.gmra.mrb[0].mxu0 %v1029
        %v1185 = vpop.f32.mrb[0].mxu0
        %v1186 = vadd.f32 %v1061, %v1185
        %v1187 = vpop.f32.mrb[0].mxu0
        %v1188 = vpop.f32.mrb[0].mxu0
        %v1189 = vadd.f32 %v1061, %v1188
        %v1190 = vpop.f32.mrb[0].mxu0
        %1191 = vmatprep.mubr.bf16.mxu0 0
        %1192 = vmatmul.mubr.bf16.gmra.mrb[0].mxu0 %v1030
        %v1193 = vpop.f32.mrb[0].mxu0
        %v1194 = vadd.f32 %v1061, %v1193
        %v1195 = vpop.f32.mrb[0].mxu0
        %v1196 = vpop.f32.mrb[0].mxu0
        %v1197 = vadd.f32 %v1061, %v1196
        %v1198 = vpop.f32.mrb[0].mxu0
        %1199 = vmatprep.mubr.bf16.mxu0 0
        %1200 = vmatmul.mubr.bf16.gmra.mrb[0].mxu0 %v1031
        %v1201 = vpop.f32.mrb[0].mxu0
        %v1202 = vadd.f32 %v1061, %v1201
        %v1203 = vpop.f32.mrb[0].mxu0
        %v1204 = vpop.f32.mrb[0].mxu0
        %v1205 = vadd.f32 %v1061, %v1204
        %v1206 = vpop.f32.mrb[0].mxu0
        %1207 = vmatprep.mubr.bf16.mxu0 0
        %1208 = vmatmul.mubr.bf16.gmra.mrb[0].mxu0 %v1032
        %v1209 = vpop.f32.mrb[0].mxu0
        %v1210 = vadd.f32 %v1061, %v1209
        %v1211 = vpop.f32.mrb[0].mxu0
        %v1212 = vpop.f32.mrb[0].mxu0
        %v1213 = vadd.f32 %v1061, %v1212
        %v1214 = vpop.f32.mrb[0].mxu0
        %1215 = vmatprep.mubr.bf16.mxu0 0
        %1216 = vmatmul.mubr.bf16.gmra.mrb[0].mxu0 %v1033
        %v1217 = vpop.f32.mrb[0].mxu0
        %v1218 = vadd.f32 %v1061, %v1217
        %v1219 = vpop.f32.mrb[0].mxu0
        %v1220 = vpop.f32.mrb[0].mxu0
        %v1221 = vadd.f32 %v1061, %v1220
        %v1222 = vpop.f32.mrb[0].mxu0
        %1223 = vmatprep.mubr.bf16.mxu0 0
        %1224 = vmatmul.mubr.bf16.gmra.mrb[0].mxu0 %v1034
        %v1225 = vpop.f32.mrb[0].mxu0
        %v1226 = vadd.f32 %v1061, %v1225
        %v1227 = vpop.f32.mrb[0].mxu0
        %v1228 = vpop.f32.mrb[0].mxu0
        %v1229 = vadd.f32 %v1061, %v1228
        %v1230 = vpop.f32.mrb[0].mxu0
        %1231 = vmatprep.mubr.bf16.mxu0 0
        %1232 = vmatmul.mubr.bf16.gmra.mrb[0].mxu0 %v1035
        %v1233 = vpop.f32.mrb[0].mxu0
        %v1234 = vadd.f32 %v1061, %v1233
        %v1235 = vpop.f32.mrb[0].mxu0
        %v1236 = vpop.f32.mrb[0].mxu0
        %v1237 = vadd.f32 %v1061, %v1236
        %v1238 = vpop.f32.mrb[0].mxu0
        %1239 = vmatprep.mubr.bf16.mxu0 0
        %1240 = vmatmul.mubr.bf16.gmra.mrb[0].mxu0 %v1036
        %v1241 = vpop.f32.mrb[0].mxu0
        %v1242 = vadd.f32 %v1061, %v1241
        %v1243 = vpop.f32.mrb[0].mxu0
        %v1244 = vpop.f32.mrb[0].mxu0
        %v1245 = vadd.f32 %v1061, %v1244
        %v1246 = vpop.f32.mrb[0].mxu0
        %1247 = vmatprep.mubr.bf16.mxu0 0
        %1248 = vmatmul.mubr.bf16.gmra.mrb[0].mxu0 %v1037
        %v1249 = vpop.f32.mrb[0].mxu0
        %v1250 = vadd.f32 %v1061, %v1249
        %v1251 = vpop.f32.mrb[0].mxu0
        %v1252 = vpop.f32.mrb[0].mxu0
        %v1253 = vadd.f32 %v1061, %v1252
        %v1254 = vpop.f32.mrb[0].mxu0
        %1255 = vmatprep.mubr.bf16.mxu0 0
        %1256 = vmatmul.mubr.bf16.gmra.mrb[0].mxu0 %v1038
        %v1257 = vpop.f32.mrb[0].mxu0
        %v1258 = vadd.f32 %v1061, %v1257
        %v1259 = vpop.f32.mrb[0].mxu0
        %v1260 = vpop.f32.mrb[0].mxu0
        %v1261 = vadd.f32 %v1061, %v1260
        %v1262 = vpop.f32.mrb[0].mxu0
        %1263 = vmatprep.mubr.bf16.mxu0 0
        %1264 = vmatmul.mubr.bf16.gmra.mrb[0].mxu0 %v1039
        %v1265 = vpop.f32.mrb[0].mxu0
        %v1266 = vadd.f32 %v1061, %v1265
        %v1267 = vpop.f32.mrb[0].mxu0
        %v1268 = vpop.f32.mrb[0].mxu0
        %v1269 = vadd.f32 %v1061, %v1268
        %v1270 = vpop.f32.mrb[0].mxu0
        %1271 = vdwg.mxu0
        %v1272 = vpack.c.bf16 %v1149, %v1146
        %v1273 = vpack.c.bf16 %v1157, %v1154
        %v1274 = vpack.c.bf16 %v1165, %v1162
        %v1275 = vpack.c.bf16 %v1173, %v1170
        %v1276 = vpack.c.bf16 %v1181, %v1178
        %v1277 = vpack.c.bf16 %v1189, %v1186
        %v1278 = vpack.c.bf16 %v1197, %v1194
        %v1279 = vpack.c.bf16 %v1205, %v1202
        %v1280 = vld [vmem:[%s11] sm:$0xf]
        %v1281 = vld [vmem:[%s11 + $0x4] sm:$0xf]
        %v1282 = vld [vmem:[%s11 + $0x8] sm:$0xf]
        %v1283 = vld [vmem:[%s11 + $0xc] sm:$0xf]
        %v1284 = vld [vmem:[%s11 + $0x10] sm:$0xf]
        %v1285 = vld [vmem:[%s11 + $0x14] sm:$0xf]
        %v1286 = vld [vmem:[%s11 + $0x18] sm:$0xf]
        %v1287 = vld [vmem:[%s11 + $0x1c] sm:$0xf]
        %v1288 = vld [vmem:[%s11 + $0x20] sm:$0xf]
        %v1289 = vld [vmem:[%s11 + $0x24] sm:$0xf]
        %v1290 = vld [vmem:[%s11 + $0x28] sm:$0xf]
        %v1291 = vld [vmem:[%s11 + $0x2c] sm:$0xf]
        %v1292 = vld [vmem:[%s11 + $0x30] sm:$0xf]
        %v1293 = vld [vmem:[%s11 + $0x34] sm:$0xf]
        %v1294 = vld [vmem:[%s11 + $0x38] sm:$0xf]
        %v1295 = vld [vmem:[%s11 + $0x3c] sm:$0xf]
        %v1296 = vpack.c.bf16 %v1213, %v1210
        %v1297 = vpack.c.bf16 %v1221, %v1218
        %v1298 = vpack.c.bf16 %v1229, %v1226
        %v1299 = vpack.c.bf16 %v1237, %v1234
        %v1300 = vpack.c.bf16 %v1245, %v1242
        %v1301 = vpack.c.bf16 %v1253, %v1250
        %v1302 = vpack.c.bf16 %v1261, %v1258
        %v1303 = vpack.c.bf16 %v1269, %v1266
        %v1304 = vld [vmem:[%s12] sm:$0xf]
        %v1305 = vld [vmem:[%s12 + $0x4] sm:$0xf]
        %v1306 = vld [vmem:[%s12 + $0x8] sm:$0xf]
        %v1307 = vld [vmem:[%s12 + $0xc] sm:$0xf]
        %v1308 = vld [vmem:[%s12 + $0x10] sm:$0xf]
        %v1309 = vld [vmem:[%s12 + $0x14] sm:$0xf]
        %v1310 = vld [vmem:[%s12 + $0x18] sm:$0xf]
        %v1311 = vld [vmem:[%s12 + $0x1c] sm:$0xf]
        %v1312 = vld [vmem:[%s12 + $0x20] sm:$0xf]
        %v1313 = vld [vmem:[%s12 + $0x24] sm:$0xf]
        %v1314 = vld [vmem:[%s12 + $0x28] sm:$0xf]
        %v1315 = vld [vmem:[%s12 + $0x2c] sm:$0xf]
        %v1316 = vld [vmem:[%s12 + $0x30] sm:$0xf]
        %v1317 = vld [vmem:[%s12 + $0x34] sm:$0xf]
        %v1318 = vld [vmem:[%s12 + $0x38] sm:$0xf]
        %v1319 = vld [vmem:[%s12 + $0x3c] sm:$0xf]
        %v1336 = vunpack.c.l.b16 %v1304
        %v1337 = vunpack.c.l.b16 %v1305
        %v1338 = vunpack.c.l.b16 %v1306
        %v1339 = vunpack.c.l.b16 %v1307
        %v1340 = vunpack.c.l.b16 %v1308
        %v1341 = vunpack.c.l.b16 %v1309
        %v1342 = vunpack.c.l.b16 %v1310
        %v1343 = vunpack.c.l.b16 %v1311
        %v1344 = vunpack.c.l.b16 %v1312
        %v1345 = vunpack.c.l.b16 %v1313
        %v1346 = vunpack.c.l.b16 %v1314
        %v1347 = vunpack.c.l.b16 %v1315
        %v1348 = vunpack.c.l.b16 %v1316
        %v1349 = vunpack.c.l.b16 %v1317
        %v1350 = vunpack.c.l.b16 %v1318
        %v1351 = vunpack.c.l.b16 %v1319
        %v1352 = vpack.c.b16 %v1337, %v1336
        %v1353 = vpack.c.b16 %v1339, %v1338
        %v1354 = vpack.c.b16 %v1341, %v1340
        %v1355 = vpack.c.b16 %v1343, %v1342
        %v1356 = vpack.c.b16 %v1345, %v1344
        %v1357 = vpack.c.b16 %v1347, %v1346
        %v1358 = vpack.c.b16 %v1349, %v1348
        %v1359 = vpack.c.b16 %v1351, %v1350
        %1368 = vmatprep.subr.bf16.mxu0 0
        %1369 = vmatpush1.bf16.msra.mxu0 %v1352
        %1370 = vmatprep.subr.bf16.mxu0 0
        %1371 = vmatpush1.bf16.msra.mxu0 %v1353
        %1372 = vmatprep.subr.bf16.mxu0 0
        %1373 = vmatpush1.bf16.msra.mxu0 %v1354
        %1374 = vmatprep.subr.bf16.mxu0 0
        %1375 = vmatpush1.bf16.msra.mxu0 %v1355
        %1376 = vmatprep.subr.bf16.mxu0 0
        %1377 = vmatpush1.bf16.msra.mxu0 %v1356
        %1378 = vmatprep.subr.bf16.mxu0 0
        %1379 = vmatpush1.bf16.msra.mxu0 %v1357
        %1380 = vmatprep.subr.bf16.mxu0 0
        %1381 = vmatpush1.bf16.msra.mxu0 %v1358
        %1382 = vmatprep.subr.bf16.mxu0 0
        %1383 = vmatpush1.bf16.msra.mxu0 %v1359
        %1384 = vmatprep.subr.bf16.mxu0 0
        %1385 = vmatpush1.bf16.msra.mxu0 0
        %1386 = vmatprep.subr.bf16.mxu0 0
        %1387 = vmatpush1.bf16.msra.mxu0 0
        %1388 = vmatprep.subr.bf16.mxu0 0
        %1389 = vmatpush1.bf16.msra.mxu0 0
        %1390 = vmatprep.subr.bf16.mxu0 0
        %1391 = vmatpush1.bf16.msra.mxu0 0
        %1392 = vmatprep.subr.bf16.mxu0 0
        %1393 = vmatpush1.bf16.msra.mxu0 0
        %1394 = vmatprep.subr.bf16.mxu0 0
        %1395 = vmatpush1.bf16.msra.mxu0 0
        %1396 = vmatprep.subr.bf16.mxu0 0
        %1397 = vmatpush1.bf16.msra.mxu0 0
        %1398 = vmatprep.subr.bf16.mxu0 0
        %1399 = vmatpush1.bf16.msra.mxu0 0
        %1400 = vmatprep.mubr.bf16.mxu0 0
        %1401 = vmatmul.mubr.bf16.gmra.mrb[0].mxu0 %v1296
        %v1402 = vpop.f32.mrb[0].mxu0
        %v1403 = vadd.f32 0.0, %v1402
        %v1404 = vpop.f32.mrb[0].mxu0
        %v1405 = vpop.f32.mrb[0].mxu0
        %v1406 = vadd.f32 0.0, %v1405
        %v1407 = vpop.f32.mrb[0].mxu0
        %1408 = vmatprep.mubr.bf16.mxu0 0
        %1409 = vmatmul.mubr.bf16.gmra.mrb[0].mxu0 %v1297
        %v1410 = vpop.f32.mrb[0].mxu0
        %v1411 = vadd.f32 0.0, %v1410
        %v1412 = vpop.f32.mrb[0].mxu0
        %v1413 = vpop.f32.mrb[0].mxu0
        %v1414 = vadd.f32 0.0, %v1413
        %v1415 = vpop.f32.mrb[0].mxu0
        %1416 = vmatprep.mubr.bf16.mxu0 0
        %1417 = vmatmul.mubr.bf16.gmra.mrb[0].mxu0 %v1298
        %v1418 = vpop.f32.mrb[0].mxu0
        %v1419 = vadd.f32 0.0, %v1418
        %v1420 = vpop.f32.mrb[0].mxu0
        %v1421 = vpop.f32.mrb[0].mxu0
        %v1422 = vadd.f32 0.0, %v1421
        %v1423 = vpop.f32.mrb[0].mxu0
        %1424 = vmatprep.mubr.bf16.mxu0 0
        %1425 = vmatmul.mubr.bf16.gmra.mrb[0].mxu0 %v1299
        %v1426 = vpop.f32.mrb[0].mxu0
        %v1427 = vadd.f32 0.0, %v1426
        %v1428 = vpop.f32.mrb[0].mxu0
        %v1429 = vpop.f32.mrb[0].mxu0
        %v1430 = vadd.f32 0.0, %v1429
        %v1431 = vpop.f32.mrb[0].mxu0
        %1432 = vmatprep.mubr.bf16.mxu0 0
        %1433 = vmatmul.mubr.bf16.gmra.mrb[0].mxu0 %v1300
        %v1434 = vpop.f32.mrb[0].mxu0
        %v1435 = vadd.f32 0.0, %v1434
        %v1436 = vpop.f32.mrb[0].mxu0
        %v1437 = vpop.f32.mrb[0].mxu0
        %v1438 = vadd.f32 0.0, %v1437
        %v1439 = vpop.f32.mrb[0].mxu0
        %1440 = vmatprep.mubr.bf16.mxu0 0
        %1441 = vmatmul.mubr.bf16.gmra.mrb[0].mxu0 %v1301
        %v1442 = vpop.f32.mrb[0].mxu0
        %v1443 = vadd.f32 0.0, %v1442
        %v1444 = vpop.f32.mrb[0].mxu0
        %v1445 = vpop.f32.mrb[0].mxu0
        %v1446 = vadd.f32 0.0, %v1445
        %v1447 = vpop.f32.mrb[0].mxu0
        %1448 = vmatprep.mubr.bf16.mxu0 0
        %1449 = vmatmul.mubr.bf16.gmra.mrb[0].mxu0 %v1302
        %v1450 = vpop.f32.mrb[0].mxu0
        %v1451 = vadd.f32 0.0, %v1450
        %v1452 = vpop.f32.mrb[0].mxu0
        %v1453 = vpop.f32.mrb[0].mxu0
        %v1454 = vadd.f32 0.0, %v1453
        %v1455 = vpop.f32.mrb[0].mxu0
        %1456 = vmatprep.mubr.bf16.mxu0 0
        %1457 = vmatmul.mubr.bf16.gmra.mrb[0].mxu0 %v1303
        %v1458 = vpop.f32.mrb[0].mxu0
        %v1459 = vadd.f32 0.0, %v1458
        %v1460 = vpop.f32.mrb[0].mxu0
        %v1461 = vpop.f32.mrb[0].mxu0
        %v1462 = vadd.f32 0.0, %v1461
        %v1463 = vpop.f32.mrb[0].mxu0
        %1464 = vdwg.mxu0
        %v1481 = vunpack.c.l.b16 %v1280
        %v1482 = vunpack.c.l.b16 %v1281
        %v1483 = vunpack.c.l.b16 %v1282
        %v1484 = vunpack.c.l.b16 %v1283
        %v1485 = vunpack.c.l.b16 %v1284
        %v1486 = vunpack.c.l.b16 %v1285
        %v1487 = vunpack.c.l.b16 %v1286
        %v1488 = vunpack.c.l.b16 %v1287
        %v1489 = vunpack.c.l.b16 %v1288
        %v1490 = vunpack.c.l.b16 %v1289
        %v1491 = vunpack.c.l.b16 %v1290
        %v1492 = vunpack.c.l.b16 %v1291
        %v1493 = vunpack.c.l.b16 %v1292
        %v1494 = vunpack.c.l.b16 %v1293
        %v1495 = vunpack.c.l.b16 %v1294
        %v1496 = vunpack.c.l.b16 %v1295
        %v1497 = vpack.c.b16 %v1482, %v1481
        %v1498 = vpack.c.b16 %v1484, %v1483
        %v1499 = vpack.c.b16 %v1486, %v1485
        %v1500 = vpack.c.b16 %v1488, %v1487
        %v1501 = vpack.c.b16 %v1490, %v1489
        %v1502 = vpack.c.b16 %v1492, %v1491
        %v1503 = vpack.c.b16 %v1494, %v1493
        %v1504 = vpack.c.b16 %v1496, %v1495
        %1513 = vmatprep.subr.bf16.mxu0 0
        %1514 = vmatpush1.bf16.msra.mxu0 %v1497
        %1515 = vmatprep.subr.bf16.mxu0 0
        %1516 = vmatpush1.bf16.msra.mxu0 %v1498
        %1517 = vmatprep.subr.bf16.mxu0 0
        %1518 = vmatpush1.bf16.msra.mxu0 %v1499
        %1519 = vmatprep.subr.bf16.mxu0 0
        %1520 = vmatpush1.bf16.msra.mxu0 %v1500
        %1521 = vmatprep.subr.bf16.mxu0 0
        %1522 = vmatpush1.bf16.msra.mxu0 %v1501
        %1523 = vmatprep.subr.bf16.mxu0 0
        %1524 = vmatpush1.bf16.msra.mxu0 %v1502
        %1525 = vmatprep.subr.bf16.mxu0 0
        %1526 = vmatpush1.bf16.msra.mxu0 %v1503
        %1527 = vmatprep.subr.bf16.mxu0 0
        %1528 = vmatpush1.bf16.msra.mxu0 %v1504
        %1529 = vmatprep.subr.bf16.mxu0 0
        %1530 = vmatpush1.bf16.msra.mxu0 0
        %1531 = vmatprep.subr.bf16.mxu0 0
        %1532 = vmatpush1.bf16.msra.mxu0 0
        %1533 = vmatprep.subr.bf16.mxu0 0
        %1534 = vmatpush1.bf16.msra.mxu0 0
        %1535 = vmatprep.subr.bf16.mxu0 0
        %1536 = vmatpush1.bf16.msra.mxu0 0
        %1537 = vmatprep.subr.bf16.mxu0 0
        %1538 = vmatpush1.bf16.msra.mxu0 0
        %1539 = vmatprep.subr.bf16.mxu0 0
        %1540 = vmatpush1.bf16.msra.mxu0 0
        %1541 = vmatprep.subr.bf16.mxu0 0
        %1542 = vmatpush1.bf16.msra.mxu0 0
        %1543 = vmatprep.subr.bf16.mxu0 0
        %1544 = vmatpush1.bf16.msra.mxu0 0
        %1545 = vmatprep.mubr.bf16.mxu0 0
        %1546 = vmatmul.mubr.bf16.gmra.mrb[0].mxu0 %v1272
        %v1547 = vpop.f32.mrb[0].mxu0
        %v1548 = vadd.f32 %v1403, %v1547
        %v1549 = vpop.f32.mrb[0].mxu0
        %v1550 = vpop.f32.mrb[0].mxu0
        %v1551 = vadd.f32 %v1406, %v1550
        %v1552 = vpop.f32.mrb[0].mxu0
        %1553 = vmatprep.mubr.bf16.mxu0 0
        %1554 = vmatmul.mubr.bf16.gmra.mrb[0].mxu0 %v1273
        %v1555 = vpop.f32.mrb[0].mxu0
        %v1556 = vadd.f32 %v1411, %v1555
        %v1557 = vpop.f32.mrb[0].mxu0
        %v1558 = vpop.f32.mrb[0].mxu0
        %v1559 = vadd.f32 %v1414, %v1558
        %v1560 = vpop.f32.mrb[0].mxu0
        %1561 = vmatprep.mubr.bf16.mxu0 0
        %1562 = vmatmul.mubr.bf16.gmra.mrb[0].mxu0 %v1274
        %v1563 = vpop.f32.mrb[0].mxu0
        %v1564 = vadd.f32 %v1419, %v1563
        %v1565 = vpop.f32.mrb[0].mxu0
        %v1566 = vpop.f32.mrb[0].mxu0
        %v1567 = vadd.f32 %v1422, %v1566
        %v1568 = vpop.f32.mrb[0].mxu0
        %1569 = vmatprep.mubr.bf16.mxu0 0
        %1570 = vmatmul.mubr.bf16.gmra.mrb[0].mxu0 %v1275
        %v1571 = vpop.f32.mrb[0].mxu0
        %v1572 = vadd.f32 %v1427, %v1571
        %v1573 = vpop.f32.mrb[0].mxu0
        %v1574 = vpop.f32.mrb[0].mxu0
        %v1575 = vadd.f32 %v1430, %v1574
        %v1576 = vpop.f32.mrb[0].mxu0
        %1577 = vmatprep.mubr.bf16.mxu0 0
        %1578 = vmatmul.mubr.bf16.gmra.mrb[0].mxu0 %v1276
        %v1579 = vpop.f32.mrb[0].mxu0
        %v1580 = vadd.f32 %v1435, %v1579
        %v1581 = vpop.f32.mrb[0].mxu0
        %v1582 = vpop.f32.mrb[0].mxu0
        %v1583 = vadd.f32 %v1438, %v1582
        %v1584 = vpop.f32.mrb[0].mxu0
        %1585 = vmatprep.mubr.bf16.mxu0 0
        %1586 = vmatmul.mubr.bf16.gmra.mrb[0].mxu0 %v1277
        %v1587 = vpop.f32.mrb[0].mxu0
        %v1588 = vadd.f32 %v1443, %v1587
        %v1589 = vpop.f32.mrb[0].mxu0
        %v1590 = vpop.f32.mrb[0].mxu0
        %v1591 = vadd.f32 %v1446, %v1590
        %v1592 = vpop.f32.mrb[0].mxu0
        %1593 = vmatprep.mubr.bf16.mxu0 0
        %1594 = vmatmul.mubr.bf16.gmra.mrb[0].mxu0 %v1278
        %v1595 = vpop.f32.mrb[0].mxu0
        %v1596 = vadd.f32 %v1451, %v1595
        %v1597 = vpop.f32.mrb[0].mxu0
        %v1598 = vpop.f32.mrb[0].mxu0
        %v1599 = vadd.f32 %v1454, %v1598
        %v1600 = vpop.f32.mrb[0].mxu0
        %1601 = vmatprep.mubr.bf16.mxu0 0
        %1602 = vmatmul.mubr.bf16.gmra.mrb[0].mxu0 %v1279
        %v1603 = vpop.f32.mrb[0].mxu0
        %v1604 = vadd.f32 %v1459, %v1603
        %v1605 = vpop.f32.mrb[0].mxu0
        %v1606 = vpop.f32.mrb[0].mxu0
        %v1607 = vadd.f32 %v1462, %v1606
        %v1608 = vpop.f32.mrb[0].mxu0
        %1609 = vdwg.mxu0
        %v1610 = vld [vmem:[%s13] sm:$0x1]
        %v1612 = vlaneseq
        %v1613 = vshrl.u32 %v1612, 7
        %v1614 = vsub.s32 0, %v1613
        %v1615 = vrot.slane %v1610, %v1614
        %v1617 = vadd.f32 %v1548, %v1615
        %v1618 = vadd.f32 %v1551, %v1615
        %v1619 = vadd.f32 %v1556, %v1615
        %v1620 = vadd.f32 %v1559, %v1615
        %v1621 = vadd.f32 %v1564, %v1615
        %v1622 = vadd.f32 %v1567, %v1615
        %v1623 = vadd.f32 %v1572, %v1615
        %v1624 = vadd.f32 %v1575, %v1615
        %v1625 = vadd.f32 %v1580, %v1615
        %v1626 = vadd.f32 %v1583, %v1615
        %v1627 = vadd.f32 %v1588, %v1615
        %v1628 = vadd.f32 %v1591, %v1615
        %v1629 = vadd.f32 %v1596, %v1615
        %v1630 = vadd.f32 %v1599, %v1615
        %v1631 = vadd.f32 %v1604, %v1615
        %v1632 = vadd.f32 %v1607, %v1615
        %v1633 = vmax.f32 %v1617, 0.0
        %v1634 = vmax.f32 %v1618, 0.0
        %v1635 = vmax.f32 %v1619, 0.0
        %v1636 = vmax.f32 %v1620, 0.0
        %v1637 = vmax.f32 %v1621, 0.0
        %v1638 = vmax.f32 %v1622, 0.0
        %v1639 = vmax.f32 %v1623, 0.0
        %v1640 = vmax.f32 %v1624, 0.0
        %v1641 = vmax.f32 %v1625, 0.0
        %v1642 = vmax.f32 %v1626, 0.0
        %v1643 = vmax.f32 %v1627, 0.0
        %v1644 = vmax.f32 %v1628, 0.0
        %v1645 = vmax.f32 %v1629, 0.0
        %v1646 = vmax.f32 %v1630, 0.0
        %v1647 = vmax.f32 %v1631, 0.0
        %v1648 = vmax.f32 %v1632, 0.0
        %v1649 = vpack.c.bf16 %v1634, %v1633
        %v1650 = vpack.c.bf16 %v1636, %v1635
        %v1651 = vpack.c.bf16 %v1638, %v1637
        %v1652 = vpack.c.bf16 %v1640, %v1639
        %v1653 = vpack.c.bf16 %v1642, %v1641
        %v1654 = vpack.c.bf16 %v1644, %v1643
        %v1655 = vpack.c.bf16 %v1646, %v1645
        %v1656 = vpack.c.bf16 %v1648, %v1647
        %v1657 = vld [vmem:[%s14] sm:$0xf]
        %v1658 = vld [vmem:[%s14 + $0x4] sm:$0xf]
        %v1659 = vld [vmem:[%s14 + $0x8] sm:$0xf]
        %v1660 = vld [vmem:[%s14 + $0xc] sm:$0xf]
        %v1661 = vld [vmem:[%s14 + $0x10] sm:$0xf]
        %v1662 = vld [vmem:[%s14 + $0x14] sm:$0xf]
        %v1663 = vld [vmem:[%s14 + $0x18] sm:$0xf]
        %v1664 = vld [vmem:[%s14 + $0x1c] sm:$0xf]
        %v1665 = vld [vmem:[%s14 + $0x20] sm:$0xf]
        %v1666 = vld [vmem:[%s14 + $0x24] sm:$0xf]
        %v1667 = vld [vmem:[%s14 + $0x28] sm:$0xf]
        %v1668 = vld [vmem:[%s14 + $0x2c] sm:$0xf]
        %v1669 = vld [vmem:[%s14 + $0x30] sm:$0xf]
        %v1670 = vld [vmem:[%s14 + $0x34] sm:$0xf]
        %v1671 = vld [vmem:[%s14 + $0x38] sm:$0xf]
        %v1672 = vld [vmem:[%s14 + $0x3c] sm:$0xf]
        %v1673 = vld [vmem:[%s15] sm:$0x1]
        %v1675 = vlaneseq
        %v1676 = vshrl.u32 %v1675, 7
        %v1677 = vsub.s32 0, %v1676
        %v1678 = vrot.slane %v1673, %v1677
        %v1696 = vunpack.c.l.b16 %v1657
        %v1697 = vunpack.c.l.b16 %v1658
        %v1698 = vunpack.c.l.b16 %v1659
        %v1699 = vunpack.c.l.b16 %v1660
        %v1700 = vunpack.c.l.b16 %v1661
        %v1701 = vunpack.c.l.b16 %v1662
        %v1702 = vunpack.c.l.b16 %v1663
        %v1703 = vunpack.c.l.b16 %v1664
        %v1704 = vunpack.c.l.b16 %v1665
        %v1705 = vunpack.c.l.b16 %v1666
        %v1706 = vunpack.c.l.b16 %v1667
        %v1707 = vunpack.c.l.b16 %v1668
        %v1708 = vunpack.c.l.b16 %v1669
        %v1709 = vunpack.c.l.b16 %v1670
        %v1710 = vunpack.c.l.b16 %v1671
        %v1711 = vunpack.c.l.b16 %v1672
        %v1712 = vpack.c.b16 %v1697, %v1696
        %v1713 = vpack.c.b16 %v1699, %v1698
        %v1714 = vpack.c.b16 %v1701, %v1700
        %v1715 = vpack.c.b16 %v1703, %v1702
        %v1716 = vpack.c.b16 %v1705, %v1704
        %v1717 = vpack.c.b16 %v1707, %v1706
        %v1718 = vpack.c.b16 %v1709, %v1708
        %v1719 = vpack.c.b16 %v1711, %v1710
        %1728 = vmatprep.subr.bf16.mxu0 0
        %1729 = vmatpush1.bf16.msra.mxu0 %v1712
        %1730 = vmatprep.subr.bf16.mxu0 0
        %1731 = vmatpush1.bf16.msra.mxu0 %v1713
        %1732 = vmatprep.subr.bf16.mxu0 0
        %1733 = vmatpush1.bf16.msra.mxu0 %v1714
        %1734 = vmatprep.subr.bf16.mxu0 0
        %1735 = vmatpush1.bf16.msra.mxu0 %v1715
        %1736 = vmatprep.subr.bf16.mxu0 0
        %1737 = vmatpush1.bf16.msra.mxu0 %v1716
        %1738 = vmatprep.subr.bf16.mxu0 0
        %1739 = vmatpush1.bf16.msra.mxu0 %v1717
        %1740 = vmatprep.subr.bf16.mxu0 0
        %1741 = vmatpush1.bf16.msra.mxu0 %v1718
        %1742 = vmatprep.subr.bf16.mxu0 0
        %1743 = vmatpush1.bf16.msra.mxu0 %v1719
        %1744 = vmatprep.subr.bf16.mxu0 0
        %1745 = vmatpush1.bf16.msra.mxu0 0
        %1746 = vmatprep.subr.bf16.mxu0 0
        %1747 = vmatpush1.bf16.msra.mxu0 0
        %1748 = vmatprep.subr.bf16.mxu0 0
        %1749 = vmatpush1.bf16.msra.mxu0 0
        %1750 = vmatprep.subr.bf16.mxu0 0
        %1751 = vmatpush1.bf16.msra.mxu0 0
        %1752 = vmatprep.subr.bf16.mxu0 0
        %1753 = vmatpush1.bf16.msra.mxu0 0
        %1754 = vmatprep.subr.bf16.mxu0 0
        %1755 = vmatpush1.bf16.msra.mxu0 0
        %1756 = vmatprep.subr.bf16.mxu0 0
        %1757 = vmatpush1.bf16.msra.mxu0 0
        %1758 = vmatprep.subr.bf16.mxu0 0
        %1759 = vmatpush1.bf16.msra.mxu0 0
        %1760 = vmatprep.mubr.bf16.mxu0 0
        %1761 = vmatmul.mubr.bf16.gmra.mrb[0].mxu0 %v1649
        %v1762 = vpop.f32.mrb[0].mxu0
        %v1763 = vadd.f32 %v1678, %v1762
        %v1764 = vpop.f32.mrb[0].mxu0
        %v1765 = vpop.f32.mrb[0].mxu0
        %v1766 = vadd.f32 %v1678, %v1765
        %v1767 = vpop.f32.mrb[0].mxu0
        %1768 = vmatprep.mubr.bf16.mxu0 0
        %1769 = vmatmul.mubr.bf16.gmra.mrb[0].mxu0 %v1650
        %v1770 = vpop.f32.mrb[0].mxu0
        %v1771 = vadd.f32 %v1678, %v1770
        %v1772 = vpop.f32.mrb[0].mxu0
        %v1773 = vpop.f32.mrb[0].mxu0
        %v1774 = vadd.f32 %v1678, %v1773
        %v1775 = vpop.f32.mrb[0].mxu0
        %1776 = vmatprep.mubr.bf16.mxu0 0
        %1777 = vmatmul.mubr.bf16.gmra.mrb[0].mxu0 %v1651
        %v1778 = vpop.f32.mrb[0].mxu0
        %v1779 = vadd.f32 %v1678, %v1778
        %v1780 = vpop.f32.mrb[0].mxu0
        %v1781 = vpop.f32.mrb[0].mxu0
        %v1782 = vadd.f32 %v1678, %v1781
        %v1783 = vpop.f32.mrb[0].mxu0
        %1784 = vmatprep.mubr.bf16.mxu0 0
        %1785 = vmatmul.mubr.bf16.gmra.mrb[0].mxu0 %v1652
        %v1786 = vpop.f32.mrb[0].mxu0
        %v1787 = vadd.f32 %v1678, %v1786
        %v1788 = vpop.f32.mrb[0].mxu0
        %v1789 = vpop.f32.mrb[0].mxu0
        %v1790 = vadd.f32 %v1678, %v1789
        %v1791 = vpop.f32.mrb[0].mxu0
        %1792 = vmatprep.mubr.bf16.mxu0 0
        %1793 = vmatmul.mubr.bf16.gmra.mrb[0].mxu0 %v1653
        %v1794 = vpop.f32.mrb[0].mxu0
        %v1795 = vadd.f32 %v1678, %v1794
        %v1796 = vpop.f32.mrb[0].mxu0
        %v1797 = vpop.f32.mrb[0].mxu0
        %v1798 = vadd.f32 %v1678, %v1797
        %v1799 = vpop.f32.mrb[0].mxu0
        %1800 = vmatprep.mubr.bf16.mxu0 0
        %1801 = vmatmul.mubr.bf16.gmra.mrb[0].mxu0 %v1654
        %v1802 = vpop.f32.mrb[0].mxu0
        %v1803 = vadd.f32 %v1678, %v1802
        %v1804 = vpop.f32.mrb[0].mxu0
        %v1805 = vpop.f32.mrb[0].mxu0
        %v1806 = vadd.f32 %v1678, %v1805
        %v1807 = vpop.f32.mrb[0].mxu0
        %1808 = vmatprep.mubr.bf16.mxu0 0
        %1809 = vmatmul.mubr.bf16.gmra.mrb[0].mxu0 %v1655
        %v1810 = vpop.f32.mrb[0].mxu0
        %v1811 = vadd.f32 %v1678, %v1810
        %v1812 = vpop.f32.mrb[0].mxu0
        %v1813 = vpop.f32.mrb[0].mxu0
        %v1814 = vadd.f32 %v1678, %v1813
        %v1815 = vpop.f32.mrb[0].mxu0
        %1816 = vmatprep.mubr.bf16.mxu0 0
        %1817 = vmatmul.mubr.bf16.gmra.mrb[0].mxu0 %v1656
        %v1818 = vpop.f32.mrb[0].mxu0
        %v1819 = vadd.f32 %v1678, %v1818
        %v1820 = vpop.f32.mrb[0].mxu0
        %v1821 = vpop.f32.mrb[0].mxu0
        %v1822 = vadd.f32 %v1678, %v1821
        %v1823 = vpop.f32.mrb[0].mxu0
        %1824 = vdwg.mxu0
        %v1825 = vsub.f32 %v1763, %v703
        %v1826 = vsub.f32 %v1766, %v704
        %v1827 = vsub.f32 %v1771, %v705
        %v1828 = vsub.f32 %v1774, %v706
        %v1829 = vsub.f32 %v1779, %v707
        %v1830 = vsub.f32 %v1782, %v708
        %v1831 = vsub.f32 %v1787, %v709
        %v1832 = vsub.f32 %v1790, %v710
        %v1833 = vsub.f32 %v1795, %v711
        %v1834 = vsub.f32 %v1798, %v712
        %v1835 = vsub.f32 %v1803, %v713
        %v1836 = vsub.f32 %v1806, %v714
        %v1837 = vsub.f32 %v1811, %v715
        %v1838 = vsub.f32 %v1814, %v716
        %v1839 = vsub.f32 %v1819, %v717
        %v1840 = vsub.f32 %v1822, %v718
        %v1841 = vmul.f32 %v1825, %v1825
        %v1842 = vmul.f32 %v1826, %v1826
        %v1843 = vmul.f32 %v1827, %v1827
        %v1844 = vmul.f32 %v1828, %v1828
        %v1845 = vmul.f32 %v1829, %v1829
        %v1846 = vmul.f32 %v1830, %v1830
        %v1847 = vmul.f32 %v1831, %v1831
        %v1848 = vmul.f32 %v1832, %v1832
        %v1849 = vmul.f32 %v1833, %v1833
        %v1850 = vmul.f32 %v1834, %v1834
        %v1851 = vmul.f32 %v1835, %v1835
        %v1852 = vmul.f32 %v1836, %v1836
        %v1853 = vmul.f32 %v1837, %v1837
        %v1854 = vmul.f32 %v1838, %v1838
        %v1855 = vmul.f32 %v1839, %v1839
        %v1856 = vmul.f32 %v1840, %v1840
        %vm1857 = vcmask 64512
        %v1858 = vsel %vm1857, %v1841, 0.0
        %v1859 = vsel %vm1857, %v1842, 0.0
        %v1860 = vadd.f32 %v1858, %v1859
        %v1861 = vsel %vm1857, %v1843, 0.0
        %v1862 = vadd.f32 %v1860, %v1861
        %v1863 = vsel %vm1857, %v1844, 0.0
        %v1864 = vadd.f32 %v1862, %v1863
        %v1865 = vsel %vm1857, %v1845, 0.0
        %v1866 = vadd.f32 %v1864, %v1865
        %v1867 = vsel %vm1857, %v1846, 0.0
        %v1868 = vadd.f32 %v1866, %v1867
        %v1869 = vsel %vm1857, %v1847, 0.0
        %v1870 = vadd.f32 %v1868, %v1869
        %v1871 = vsel %vm1857, %v1848, 0.0
        %v1872 = vadd.f32 %v1870, %v1871
        %v1873 = vsel %vm1857, %v1849, 0.0
        %v1874 = vadd.f32 %v1872, %v1873
        %v1875 = vsel %vm1857, %v1850, 0.0
        %v1876 = vadd.f32 %v1874, %v1875
        %v1877 = vsel %vm1857, %v1851, 0.0
        %v1878 = vadd.f32 %v1876, %v1877
        %v1879 = vsel %vm1857, %v1852, 0.0
        %v1880 = vadd.f32 %v1878, %v1879
        %v1881 = vsel %vm1857, %v1853, 0.0
        %v1882 = vadd.f32 %v1880, %v1881
        %v1883 = vsel %vm1857, %v1854, 0.0
        %v1884 = vadd.f32 %v1882, %v1883
        %v1885 = vsel %vm1857, %v1855, 0.0
        %v1886 = vadd.f32 %v1884, %v1885
        %v1887 = vsel %vm1857, %v1856, 0.0
        %v1888 = vadd.f32 %v1886, %v1887
        %1889 = vadd.xlane.f32.xlu0 %v1888
        %v1890 = vpop.xlane.xlu0 %1889
        %v1891 = vrot.slane %v1890, 4
        %v1892 = vadd.f32 %v1890, %v1891
        %v1893 = vrot.slane %v1892, 2
        %v1894 = vadd.f32 %v1892, %v1893
        %v1895 = vrot.slane %v1894, 1
        %v1896 = vadd.f32 %v1894, %v1895
        %s1897 = vtos %v1896
        %v1898 = vpack.c.bf16 %v704, %v703
        %v1899 = vpack.c.bf16 %v706, %v705
        %v1900 = vpack.c.bf16 %v708, %v707
        %v1901 = vpack.c.bf16 %v710, %v709
        %v1902 = vpack.c.bf16 %v712, %v711
        %v1903 = vpack.c.bf16 %v714, %v713
        %v1904 = vpack.c.bf16 %v716, %v715
        %v1905 = vpack.c.bf16 %v718, %v717
        %v1906 = vld [vmem:[%s6] sm:$0xf]
        %v1907 = vld [vmem:[%s7] sm:$0xf]
        %v1908 = vld [vmem:[%s7 + $0x4] sm:$0xf]
        %v1909 = vld [vmem:[%s7 + $0x8] sm:$0xf]
        %v1910 = vld [vmem:[%s7 + $0xc] sm:$0xf]
        %v1911 = vld [vmem:[%s7 + $0x10] sm:$0xf]
        %v1912 = vld [vmem:[%s7 + $0x14] sm:$0xf]
        %v1913 = vld [vmem:[%s7 + $0x18] sm:$0xf]
        %v1914 = vld [vmem:[%s7 + $0x1c] sm:$0xf]
        %v1915 = vld [vmem:[%s7 + $0x20] sm:$0xf]
        %v1916 = vld [vmem:[%s7 + $0x24] sm:$0xf]
        %v1917 = vld [vmem:[%s7 + $0x28] sm:$0xf]
        %v1918 = vld [vmem:[%s7 + $0x2c] sm:$0xf]
        %v1919 = vld [vmem:[%s7 + $0x30] sm:$0xf]
        %v1920 = vld [vmem:[%s7 + $0x34] sm:$0xf]
        %v1921 = vld [vmem:[%s7 + $0x38] sm:$0xf]
        %v1922 = vld [vmem:[%s7 + $0x3c] sm:$0xf]
        %v1939 = vunpack.c.l.b16 %v1907
        %v1940 = vunpack.c.l.b16 %v1908
        %v1941 = vunpack.c.l.b16 %v1909
        %v1942 = vunpack.c.l.b16 %v1910
        %v1943 = vunpack.c.l.b16 %v1911
        %v1944 = vunpack.c.l.b16 %v1912
        %v1945 = vunpack.c.l.b16 %v1913
        %v1946 = vunpack.c.l.b16 %v1914
        %v1947 = vunpack.c.l.b16 %v1915
        %v1948 = vunpack.c.l.b16 %v1916
        %v1949 = vunpack.c.l.b16 %v1917
        %v1950 = vunpack.c.l.b16 %v1918
        %v1951 = vunpack.c.l.b16 %v1919
        %v1952 = vunpack.c.l.b16 %v1920
        %v1953 = vunpack.c.l.b16 %v1921
        %v1954 = vunpack.c.l.b16 %v1922
        %v1955 = vpack.c.b16 %v1940, %v1939
        %v1956 = vpack.c.b16 %v1942, %v1941
        %v1957 = vpack.c.b16 %v1944, %v1943
        %v1958 = vpack.c.b16 %v1946, %v1945
        %v1959 = vpack.c.b16 %v1948, %v1947
        %v1960 = vpack.c.b16 %v1950, %v1949
        %v1961 = vpack.c.b16 %v1952, %v1951
        %v1962 = vpack.c.b16 %v1954, %v1953
        %1971 = vmatprep.subr.bf16.mxu0 0
        %1972 = vmatpush1.bf16.msra.mxu0 %v1955
        %1973 = vmatprep.subr.bf16.mxu0 0
        %1974 = vmatpush1.bf16.msra.mxu0 %v1956
        %1975 = vmatprep.subr.bf16.mxu0 0
        %1976 = vmatpush1.bf16.msra.mxu0 %v1957
        %1977 = vmatprep.subr.bf16.mxu0 0
        %1978 = vmatpush1.bf16.msra.mxu0 %v1958
        %1979 = vmatprep.subr.bf16.mxu0 0
        %1980 = vmatpush1.bf16.msra.mxu0 %v1959
        %1981 = vmatprep.subr.bf16.mxu0 0
        %1982 = vmatpush1.bf16.msra.mxu0 %v1960
        %1983 = vmatprep.subr.bf16.mxu0 0
        %1984 = vmatpush1.bf16.msra.mxu0 %v1961
        %1985 = vmatprep.subr.bf16.mxu0 0
        %1986 = vmatpush1.bf16.msra.mxu0 %v1962
        %1987 = vmatprep.subr.bf16.mxu0 0
        %1988 = vmatpush1.bf16.msra.mxu0 0
        %1989 = vmatprep.subr.bf16.mxu0 0
        %1990 = vmatpush1.bf16.msra.mxu0 0
        %1991 = vmatprep.subr.bf16.mxu0 0
        %1992 = vmatpush1.bf16.msra.mxu0 0
        %1993 = vmatprep.subr.bf16.mxu0 0
        %1994 = vmatpush1.bf16.msra.mxu0 0
        %1995 = vmatprep.subr.bf16.mxu0 0
        %1996 = vmatpush1.bf16.msra.mxu0 0
        %1997 = vmatprep.subr.bf16.mxu0 0
        %1998 = vmatpush1.bf16.msra.mxu0 0
        %1999 = vmatprep.subr.bf16.mxu0 0
        %2000 = vmatpush1.bf16.msra.mxu0 0
        %2001 = vmatprep.subr.bf16.mxu0 0
        %2002 = vmatpush1.bf16.msra.mxu0 0
        %2003 = vmatprep.mubr.bf16.mxu0 0
        %2004 = vmatmul.mubr.bf16.gmra.mrb[0].mxu0 %v1272
        %v2005 = vpop.f32.mrb[0].mxu0
        %v2006 = vadd.f32 0.0, %v2005
        %v2007 = vpop.f32.mrb[0].mxu0
        %v2008 = vpop.f32.mrb[0].mxu0
        %v2009 = vadd.f32 0.0, %v2008
        %v2010 = vpop.f32.mrb[0].mxu0
        %2011 = vmatprep.mubr.bf16.mxu0 0
        %2012 = vmatmul.mubr.bf16.gmra.mrb[0].mxu0 %v1273
        %v2013 = vpop.f32.mrb[0].mxu0
        %v2014 = vadd.f32 0.0, %v2013
        %v2015 = vpop.f32.mrb[0].mxu0
        %v2016 = vpop.f32.mrb[0].mxu0
        %v2017 = vadd.f32 0.0, %v2016
        %v2018 = vpop.f32.mrb[0].mxu0
        %2019 = vmatprep.mubr.bf16.mxu0 0
        %2020 = vmatmul.mubr.bf16.gmra.mrb[0].mxu0 %v1274
        %v2021 = vpop.f32.mrb[0].mxu0
        %v2022 = vadd.f32 0.0, %v2021
        %v2023 = vpop.f32.mrb[0].mxu0
        %v2024 = vpop.f32.mrb[0].mxu0
        %v2025 = vadd.f32 0.0, %v2024
        %v2026 = vpop.f32.mrb[0].mxu0
        %2027 = vmatprep.mubr.bf16.mxu0 0
        %2028 = vmatmul.mubr.bf16.gmra.mrb[0].mxu0 %v1275
        %v2029 = vpop.f32.mrb[0].mxu0
        %v2030 = vadd.f32 0.0, %v2029
        %v2031 = vpop.f32.mrb[0].mxu0
        %v2032 = vpop.f32.mrb[0].mxu0
        %v2033 = vadd.f32 0.0, %v2032
        %v2034 = vpop.f32.mrb[0].mxu0
        %2035 = vmatprep.mubr.bf16.mxu0 0
        %2036 = vmatmul.mubr.bf16.gmra.mrb[0].mxu0 %v1276
        %v2037 = vpop.f32.mrb[0].mxu0
        %v2038 = vadd.f32 0.0, %v2037
        %v2039 = vpop.f32.mrb[0].mxu0
        %v2040 = vpop.f32.mrb[0].mxu0
        %v2041 = vadd.f32 0.0, %v2040
        %v2042 = vpop.f32.mrb[0].mxu0
        %2043 = vmatprep.mubr.bf16.mxu0 0
        %2044 = vmatmul.mubr.bf16.gmra.mrb[0].mxu0 %v1277
        %v2045 = vpop.f32.mrb[0].mxu0
        %v2046 = vadd.f32 0.0, %v2045
        %v2047 = vpop.f32.mrb[0].mxu0
        %v2048 = vpop.f32.mrb[0].mxu0
        %v2049 = vadd.f32 0.0, %v2048
        %v2050 = vpop.f32.mrb[0].mxu0
        %2051 = vmatprep.mubr.bf16.mxu0 0
        %2052 = vmatmul.mubr.bf16.gmra.mrb[0].mxu0 %v1278
        %v2053 = vpop.f32.mrb[0].mxu0
        %v2054 = vadd.f32 0.0, %v2053
        %v2055 = vpop.f32.mrb[0].mxu0
        %v2056 = vpop.f32.mrb[0].mxu0
        %v2057 = vadd.f32 0.0, %v2056
        %v2058 = vpop.f32.mrb[0].mxu0
        %2059 = vmatprep.mubr.bf16.mxu0 0
        %2060 = vmatmul.mubr.bf16.gmra.mrb[0].mxu0 %v1279
        %v2061 = vpop.f32.mrb[0].mxu0
        %v2062 = vadd.f32 0.0, %v2061
        %v2063 = vpop.f32.mrb[0].mxu0
        %v2064 = vpop.f32.mrb[0].mxu0
        %v2065 = vadd.f32 0.0, %v2064
        %v2066 = vpop.f32.mrb[0].mxu0
        %2067 = vdwg.mxu0
        %v2069 = vsel %vm1857, %v1898, 0
        %v2072 = vsel %vm1857, %v1899, 0
        %v2075 = vsel %vm1857, %v1900, 0
        %v2078 = vsel %vm1857, %v1901, 0
        %v2081 = vsel %vm1857, %v1902, 0
        %v2084 = vsel %vm1857, %v1903, 0
        %v2087 = vsel %vm1857, %v1904, 0
        %v2090 = vsel %vm1857, %v1905, 0
        %vm2092 = vcmask 1043456
        %v2094 = vsel %vm2092, %v1906, 0
        %2096 = vmatprep.subr.bf16.mxu0 0
        %2097 = vmatpush1.bf16.msra.mxu0 %v2094
        %2098 = vmatprep.subr.bf16.mxu0 0
        %2099 = vmatpush1.bf16.msra.mxu0 0
        %2100 = vmatprep.subr.bf16.mxu0 0
        %2101 = vmatpush1.bf16.msra.mxu0 0
        %2102 = vmatprep.subr.bf16.mxu0 0
        %2103 = vmatpush1.bf16.msra.mxu0 0
        %2104 = vmatprep.subr.bf16.mxu0 0
        %2105 = vmatpush1.bf16.msra.mxu0 0
        %2106 = vmatprep.subr.bf16.mxu0 0
        %2107 = vmatpush1.bf16.msra.mxu0 0
        %2108 = vmatprep.subr.bf16.mxu0 0
        %2109 = vmatpush1.bf16.msra.mxu0 0
        %2110 = vmatprep.subr.bf16.mxu0 0
        %2111 = vmatpush1.bf16.msra.mxu0 0
        %2112 = vmatprep.subr.bf16.mxu0 0
        %2113 = vmatpush1.bf16.msra.mxu0 0
        %2114 = vmatprep.subr.bf16.mxu0 0
        %2115 = vmatpush1.bf16.msra.mxu0 0
        %2116 = vmatprep.subr.bf16.mxu0 0
        %2117 = vmatpush1.bf16.msra.mxu0 0
        %2118 = vmatprep.subr.bf16.mxu0 0
        %2119 = vmatpush1.bf16.msra.mxu0 0
        %2120 = vmatprep.subr.bf16.mxu0 0
        %2121 = vmatpush1.bf16.msra.mxu0 0
        %2122 = vmatprep.subr.bf16.mxu0 0
        %2123 = vmatpush1.bf16.msra.mxu0 0
        %2124 = vmatprep.subr.bf16.mxu0 0
        %2125 = vmatpush1.bf16.msra.mxu0 0
        %2126 = vmatprep.subr.bf16.mxu0 0
        %2127 = vmatpush1.bf16.msra.mxu0 0
        %2128 = vmatprep.mubr.bf16.mxu0 0
        %2129 = vmatmul.mubr.bf16.gmra.mrb[0].mxu0 %v2069
        %v2130 = vpop.f32.mrb[0].mxu0
        %v2131 = vadd.f32 %v2006, %v2130
        %v2132 = vpop.f32.mrb[0].mxu0
        %v2133 = vpop.f32.mrb[0].mxu0
        %v2134 = vadd.f32 %v2009, %v2133
        %v2135 = vpop.f32.mrb[0].mxu0
        %2136 = vmatprep.mubr.bf16.mxu0 0
        %2137 = vmatmul.mubr.bf16.gmra.mrb[0].mxu0 %v2072
        %v2138 = vpop.f32.mrb[0].mxu0
        %v2139 = vadd.f32 %v2014, %v2138
        %v2140 = vpop.f32.mrb[0].mxu0
        %v2141 = vpop.f32.mrb[0].mxu0
        %v2142 = vadd.f32 %v2017, %v2141
        %v2143 = vpop.f32.mrb[0].mxu0
        %2144 = vmatprep.mubr.bf16.mxu0 0
        %2145 = vmatmul.mubr.bf16.gmra.mrb[0].mxu0 %v2075
        %v2146 = vpop.f32.mrb[0].mxu0
        %v2147 = vadd.f32 %v2022, %v2146
        %v2148 = vpop.f32.mrb[0].mxu0
        %v2149 = vpop.f32.mrb[0].mxu0
        %v2150 = vadd.f32 %v2025, %v2149
        %v2151 = vpop.f32.mrb[0].mxu0
        %2152 = vmatprep.mubr.bf16.mxu0 0
        %2153 = vmatmul.mubr.bf16.gmra.mrb[0].mxu0 %v2078
        %v2154 = vpop.f32.mrb[0].mxu0
        %v2155 = vadd.f32 %v2030, %v2154
        %v2156 = vpop.f32.mrb[0].mxu0
        %v2157 = vpop.f32.mrb[0].mxu0
        %v2158 = vadd.f32 %v2033, %v2157
        %v2159 = vpop.f32.mrb[0].mxu0
        %2160 = vmatprep.mubr.bf16.mxu0 0
        %2161 = vmatmul.mubr.bf16.gmra.mrb[0].mxu0 %v2081
        %v2162 = vpop.f32.mrb[0].mxu0
        %v2163 = vadd.f32 %v2038, %v2162
        %v2164 = vpop.f32.mrb[0].mxu0
        %v2165 = vpop.f32.mrb[0].mxu0
        %v2166 = vadd.f32 %v2041, %v2165
        %v2167 = vpop.f32.mrb[0].mxu0
        %2168 = vmatprep.mubr.bf16.mxu0 0
        %2169 = vmatmul.mubr.bf16.gmra.mrb[0].mxu0 %v2084
        %v2170 = vpop.f32.mrb[0].mxu0
        %v2171 = vadd.f32 %v2046, %v2170
        %v2172 = vpop.f32.mrb[0].mxu0
        %v2173 = vpop.f32.mrb[0].mxu0
        %v2174 = vadd.f32 %v2049, %v2173
        %v2175 = vpop.f32.mrb[0].mxu0
        %2176 = vmatprep.mubr.bf16.mxu0 0
        %2177 = vmatmul.mubr.bf16.gmra.mrb[0].mxu0 %v2087
        %v2178 = vpop.f32.mrb[0].mxu0
        %v2179 = vadd.f32 %v2054, %v2178
        %v2180 = vpop.f32.mrb[0].mxu0
        %v2181 = vpop.f32.mrb[0].mxu0
        %v2182 = vadd.f32 %v2057, %v2181
        %v2183 = vpop.f32.mrb[0].mxu0
        %2184 = vmatprep.mubr.bf16.mxu0 0
        %2185 = vmatmul.mubr.bf16.gmra.mrb[0].mxu0 %v2090
        %v2186 = vpop.f32.mrb[0].mxu0
        %v2187 = vadd.f32 %v2062, %v2186
        %v2188 = vpop.f32.mrb[0].mxu0
        %v2189 = vpop.f32.mrb[0].mxu0
        %v2190 = vadd.f32 %v2065, %v2189
        %v2191 = vpop.f32.mrb[0].mxu0
        %2192 = vdwg.mxu0
        %v2193 = vld [vmem:[%s8] sm:$0x1]
        %v2195 = vlaneseq
        %v2196 = vshrl.u32 %v2195, 7
        %v2197 = vsub.s32 0, %v2196
        %v2198 = vrot.slane %v2193, %v2197
        %v2200 = vadd.f32 %v2131, %v2198
        %v2201 = vadd.f32 %v2134, %v2198
        %v2202 = vadd.f32 %v2139, %v2198
        %v2203 = vadd.f32 %v2142, %v2198
        %v2204 = vadd.f32 %v2147, %v2198
        %v2205 = vadd.f32 %v2150, %v2198
        %v2206 = vadd.f32 %v2155, %v2198
        %v2207 = vadd.f32 %v2158, %v2198
        %v2208 = vadd.f32 %v2163, %v2198
        %v2209 = vadd.f32 %v2166, %v2198
        %v2210 = vadd.f32 %v2171, %v2198
        %v2211 = vadd.f32 %v2174, %v2198
        %v2212 = vadd.f32 %v2179, %v2198
        %v2213 = vadd.f32 %v2182, %v2198
        %v2214 = vadd.f32 %v2187, %v2198
        %v2215 = vadd.f32 %v2190, %v2198
        %v2216 = vmax.f32 %v2200, 0.0
        %v2217 = vmax.f32 %v2201, 0.0
        %v2218 = vmax.f32 %v2202, 0.0
        %v2219 = vmax.f32 %v2203, 0.0
        %v2220 = vmax.f32 %v2204, 0.0
        %v2221 = vmax.f32 %v2205, 0.0
        %v2222 = vmax.f32 %v2206, 0.0
        %v2223 = vmax.f32 %v2207, 0.0
        %v2224 = vmax.f32 %v2208, 0.0
        %v2225 = vmax.f32 %v2209, 0.0
        %v2226 = vmax.f32 %v2210, 0.0
        %v2227 = vmax.f32 %v2211, 0.0
        %v2228 = vmax.f32 %v2212, 0.0
        %v2229 = vmax.f32 %v2213, 0.0
        %v2230 = vmax.f32 %v2214, 0.0
        %v2231 = vmax.f32 %v2215, 0.0
        %v2232 = vpack.c.bf16 %v2217, %v2216
        %v2233 = vpack.c.bf16 %v2219, %v2218
        %v2234 = vpack.c.bf16 %v2221, %v2220
        %v2235 = vpack.c.bf16 %v2223, %v2222
        %v2236 = vpack.c.bf16 %v2225, %v2224
        %v2237 = vpack.c.bf16 %v2227, %v2226
        %v2238 = vpack.c.bf16 %v2229, %v2228
        %v2239 = vpack.c.bf16 %v2231, %v2230
        %v2240 = vld [vmem:[%s9] sm:$0xf]
        %v2241 = vld [vmem:[%s9 + $0x4] sm:$0xf]
        %v2242 = vld [vmem:[%s9 + $0x8] sm:$0xf]
        %v2243 = vld [vmem:[%s9 + $0xc] sm:$0xf]
        %v2244 = vld [vmem:[%s9 + $0x10] sm:$0xf]
        %v2245 = vld [vmem:[%s9 + $0x14] sm:$0xf]
        %v2246 = vld [vmem:[%s9 + $0x18] sm:$0xf]
        %v2247 = vld [vmem:[%s9 + $0x1c] sm:$0xf]
        %v2248 = vld [vmem:[%s9 + $0x20] sm:$0xf]
        %v2249 = vld [vmem:[%s9 + $0x24] sm:$0xf]
        %v2250 = vld [vmem:[%s9 + $0x28] sm:$0xf]
        %v2251 = vld [vmem:[%s9 + $0x2c] sm:$0xf]
        %v2252 = vld [vmem:[%s9 + $0x30] sm:$0xf]
        %v2253 = vld [vmem:[%s9 + $0x34] sm:$0xf]
        %v2254 = vld [vmem:[%s9 + $0x38] sm:$0xf]
        %v2255 = vld [vmem:[%s9 + $0x3c] sm:$0xf]
        %v2256 = vld [vmem:[%s10] sm:$0x1]
        %v2258 = vlaneseq
        %v2259 = vshrl.u32 %v2258, 7
        %v2260 = vsub.s32 0, %v2259
        %v2261 = vrot.slane %v2256, %v2260
        %v2279 = vunpack.c.l.b16 %v2240
        %v2280 = vunpack.c.l.b16 %v2241
        %v2281 = vunpack.c.l.b16 %v2242
        %v2282 = vunpack.c.l.b16 %v2243
        %v2283 = vunpack.c.l.b16 %v2244
        %v2284 = vunpack.c.l.b16 %v2245
        %v2285 = vunpack.c.l.b16 %v2246
        %v2286 = vunpack.c.l.b16 %v2247
        %v2287 = vunpack.c.l.b16 %v2248
        %v2288 = vunpack.c.l.b16 %v2249
        %v2289 = vunpack.c.l.b16 %v2250
        %v2290 = vunpack.c.l.b16 %v2251
        %v2291 = vunpack.c.l.b16 %v2252
        %v2292 = vunpack.c.l.b16 %v2253
        %v2293 = vunpack.c.l.b16 %v2254
        %v2294 = vunpack.c.l.b16 %v2255
        %v2295 = vpack.c.b16 %v2280, %v2279
        %v2296 = vpack.c.b16 %v2282, %v2281
        %v2297 = vpack.c.b16 %v2284, %v2283
        %v2298 = vpack.c.b16 %v2286, %v2285
        %v2299 = vpack.c.b16 %v2288, %v2287
        %v2300 = vpack.c.b16 %v2290, %v2289
        %v2301 = vpack.c.b16 %v2292, %v2291
        %v2302 = vpack.c.b16 %v2294, %v2293
        %2311 = vmatprep.subr.bf16.mxu0 0
        %2312 = vmatpush1.bf16.msra.mxu0 %v2295
        %2313 = vmatprep.subr.bf16.mxu0 0
        %2314 = vmatpush1.bf16.msra.mxu0 %v2296
        %2315 = vmatprep.subr.bf16.mxu0 0
        %2316 = vmatpush1.bf16.msra.mxu0 %v2297
        %2317 = vmatprep.subr.bf16.mxu0 0
        %2318 = vmatpush1.bf16.msra.mxu0 %v2298
        %2319 = vmatprep.subr.bf16.mxu0 0
        %2320 = vmatpush1.bf16.msra.mxu0 %v2299
        %2321 = vmatprep.subr.bf16.mxu0 0
        %2322 = vmatpush1.bf16.msra.mxu0 %v2300
        %2323 = vmatprep.subr.bf16.mxu0 0
        %2324 = vmatpush1.bf16.msra.mxu0 %v2301
        %2325 = vmatprep.subr.bf16.mxu0 0
        %2326 = vmatpush1.bf16.msra.mxu0 %v2302
        %2327 = vmatprep.subr.bf16.mxu0 0
        %2328 = vmatpush1.bf16.msra.mxu0 0
        %2329 = vmatprep.subr.bf16.mxu0 0
        %2330 = vmatpush1.bf16.msra.mxu0 0
        %2331 = vmatprep.subr.bf16.mxu0 0
        %2332 = vmatpush1.bf16.msra.mxu0 0
        %2333 = vmatprep.subr.bf16.mxu0 0
        %2334 = vmatpush1.bf16.msra.mxu0 0
        %2335 = vmatprep.subr.bf16.mxu0 0
        %2336 = vmatpush1.bf16.msra.mxu0 0
        %2337 = vmatprep.subr.bf16.mxu0 0
        %2338 = vmatpush1.bf16.msra.mxu0 0
        %2339 = vmatprep.subr.bf16.mxu0 0
        %2340 = vmatpush1.bf16.msra.mxu0 0
        %2341 = vmatprep.subr.bf16.mxu0 0
        %2342 = vmatpush1.bf16.msra.mxu0 0
        %2343 = vmatprep.mubr.bf16.mxu0 0
        %2344 = vmatmul.mubr.bf16.gmra.mrb[0].mxu0 %v2232
        %v2345 = vpop.f32.mrb[0].mxu0
        %v2346 = vadd.f32 %v2261, %v2345
        %v2347 = vpop.f32.mrb[0].mxu0
        %v2348 = vpop.f32.mrb[0].mxu0
        %v2349 = vadd.f32 %v2261, %v2348
        %v2350 = vpop.f32.mrb[0].mxu0
        %2351 = vmatprep.mubr.bf16.mxu0 0
        %2352 = vmatmul.mubr.bf16.gmra.mrb[0].mxu0 %v2233
        %v2353 = vpop.f32.mrb[0].mxu0
        %v2354 = vadd.f32 %v2261, %v2353
        %v2355 = vpop.f32.mrb[0].mxu0
        %v2356 = vpop.f32.mrb[0].mxu0
        %v2357 = vadd.f32 %v2261, %v2356
        %v2358 = vpop.f32.mrb[0].mxu0
        %2359 = vmatprep.mubr.bf16.mxu0 0
        %2360 = vmatmul.mubr.bf16.gmra.mrb[0].mxu0 %v2234
        %v2361 = vpop.f32.mrb[0].mxu0
        %v2362 = vadd.f32 %v2261, %v2361
        %v2363 = vpop.f32.mrb[0].mxu0
        %v2364 = vpop.f32.mrb[0].mxu0
        %v2365 = vadd.f32 %v2261, %v2364
        %v2366 = vpop.f32.mrb[0].mxu0
        %2367 = vmatprep.mubr.bf16.mxu0 0
        %2368 = vmatmul.mubr.bf16.gmra.mrb[0].mxu0 %v2235
        %v2369 = vpop.f32.mrb[0].mxu0
        %v2370 = vadd.f32 %v2261, %v2369
        %v2371 = vpop.f32.mrb[0].mxu0
        %v2372 = vpop.f32.mrb[0].mxu0
        %v2373 = vadd.f32 %v2261, %v2372
        %v2374 = vpop.f32.mrb[0].mxu0
        %2375 = vmatprep.mubr.bf16.mxu0 0
        %2376 = vmatmul.mubr.bf16.gmra.mrb[0].mxu0 %v2236
        %v2377 = vpop.f32.mrb[0].mxu0
        %v2378 = vadd.f32 %v2261, %v2377
        %v2379 = vpop.f32.mrb[0].mxu0
        %v2380 = vpop.f32.mrb[0].mxu0
        %v2381 = vadd.f32 %v2261, %v2380
        %v2382 = vpop.f32.mrb[0].mxu0
        %2383 = vmatprep.mubr.bf16.mxu0 0
        %2384 = vmatmul.mubr.bf16.gmra.mrb[0].mxu0 %v2237
        %v2385 = vpop.f32.mrb[0].mxu0
        %v2386 = vadd.f32 %v2261, %v2385
        %v2387 = vpop.f32.mrb[0].mxu0
        %v2388 = vpop.f32.mrb[0].mxu0
        %v2389 = vadd.f32 %v2261, %v2388
        %v2390 = vpop.f32.mrb[0].mxu0
        %2391 = vmatprep.mubr.bf16.mxu0 0
        %2392 = vmatmul.mubr.bf16.gmra.mrb[0].mxu0 %v2238
        %v2393 = vpop.f32.mrb[0].mxu0
        %v2394 = vadd.f32 %v2261, %v2393
        %v2395 = vpop.f32.mrb[0].mxu0
        %v2396 = vpop.f32.mrb[0].mxu0
        %v2397 = vadd.f32 %v2261, %v2396
        %v2398 = vpop.f32.mrb[0].mxu0
        %2399 = vmatprep.mubr.bf16.mxu0 0
        %2400 = vmatmul.mubr.bf16.gmra.mrb[0].mxu0 %v2239
        %v2401 = vpop.f32.mrb[0].mxu0
        %v2402 = vadd.f32 %v2261, %v2401
        %v2403 = vpop.f32.mrb[0].mxu0
        %v2404 = vpop.f32.mrb[0].mxu0
        %v2405 = vadd.f32 %v2261, %v2404
        %v2406 = vpop.f32.mrb[0].mxu0
        %2407 = vdwg.mxu0
        %v2408 = vsub.f32 %v2346, %v1210
        %v2409 = vsub.f32 %v2349, %v1213
        %v2410 = vsub.f32 %v2354, %v1218
        %v2411 = vsub.f32 %v2357, %v1221
        %v2412 = vsub.f32 %v2362, %v1226
        %v2413 = vsub.f32 %v2365, %v1229
        %v2414 = vsub.f32 %v2370, %v1234
        %v2415 = vsub.f32 %v2373, %v1237
        %v2416 = vsub.f32 %v2378, %v1242
        %v2417 = vsub.f32 %v2381, %v1245
        %v2418 = vsub.f32 %v2386, %v1250
        %v2419 = vsub.f32 %v2389, %v1253
        %v2420 = vsub.f32 %v2394, %v1258
        %v2421 = vsub.f32 %v2397, %v1261
        %v2422 = vsub.f32 %v2402, %v1266
        %v2423 = vsub.f32 %v2405, %v1269
        %v2424 = vmul.f32 %v2408, %v2408
        %v2425 = vmul.f32 %v2409, %v2409
        %v2426 = vmul.f32 %v2410, %v2410
        %v2427 = vmul.f32 %v2411, %v2411
        %v2428 = vmul.f32 %v2412, %v2412
        %v2429 = vmul.f32 %v2413, %v2413
        %v2430 = vmul.f32 %v2414, %v2414
        %v2431 = vmul.f32 %v2415, %v2415
        %v2432 = vmul.f32 %v2416, %v2416
        %v2433 = vmul.f32 %v2417, %v2417
        %v2434 = vmul.f32 %v2418, %v2418
        %v2435 = vmul.f32 %v2419, %v2419
        %v2436 = vmul.f32 %v2420, %v2420
        %v2437 = vmul.f32 %v2421, %v2421
        %v2438 = vmul.f32 %v2422, %v2422
        %v2439 = vmul.f32 %v2423, %v2423
        %v2440 = vadd.f32 %v2424, %v2425
        %v2441 = vadd.f32 %v2440, %v2426
        %v2442 = vadd.f32 %v2441, %v2427
        %v2443 = vadd.f32 %v2442, %v2428
        %v2444 = vadd.f32 %v2443, %v2429
        %v2445 = vadd.f32 %v2444, %v2430
        %v2446 = vadd.f32 %v2445, %v2431
        %v2447 = vadd.f32 %v2446, %v2432
        %v2448 = vadd.f32 %v2447, %v2433
        %v2449 = vadd.f32 %v2448, %v2434
        %v2450 = vadd.f32 %v2449, %v2435
        %v2451 = vadd.f32 %v2450, %v2436
        %v2452 = vadd.f32 %v2451, %v2437
        %v2453 = vadd.f32 %v2452, %v2438
        %v2454 = vadd.f32 %v2453, %v2439
        %2455 = vadd.xlane.f32.xlu0 %v2454
        %v2456 = vpop.xlane.xlu0 %2455
        %v2457 = vrot.slane %v2456, 4
        %v2458 = vadd.f32 %v2456, %v2457
        %v2459 = vrot.slane %v2458, 2
        %v2460 = vadd.f32 %v2458, %v2459
        %v2461 = vrot.slane %v2460, 1
        %v2462 = vadd.f32 %v2460, %v2461
        %s2463 = vtos %v2462
        %v2464 = vlaneseq
        %v2465 = vand.u32 %v2464, 127
        %vm2466 = vcmp.eq.s32.totalorder %v2465, 0
        %vm2467 = vcmp.eq.s32.totalorder %v2465, 1
        %v2468 = vstv %s2463
        %v2469 = vsel %vm2467, %v2468, 0.0
        %v2470 = vstv %s1897
        %v2471 = vsel %vm2466, %v2470, %v2469
        %2472 = vst [vmem:[%s694] sm:$0xff] %v2471
        %s2473 = sand.u32 %s384, 1
        %s2474 = scalar_lea.sflag [#allocation4], %s2473
        %s2475 = sand.u32 %s384, 1
        %s2476 = smul.addr %s2475, 8
        %s2477 = scalar_lea.vmem [#allocation3], %s2476
        // Predicated region
        $region123: #{tpu_custom_call.1} parent=117 // pred_check
          %p2478 = pneg %p394
        $region124: #{tpu_custom_call.1} parent=117 // pred_check_branch
          %2480 = sbr.rel (%p2478) target = $region126
        $region125: #{tpu_custom_call.1} parent=117 // pred_region
          %s2482 = ssub.s32 128, 128
          %2483 = vsyncadd %s2474, %s2482
          %s2484 = smul.addr %s30, 128
          %s2485 = scalar_lea.hbm %s16, %s2484
          %s2487 = sshll.u32 %s2477, 4
          %s2488 = int_to_ptr.vmem [resolvable:$true] %s2487
          %2490 = dma.vmem_to_hbm [thread:$0]  %s2488, 128, %s2485, %s2474
        $region126: #{tpu_custom_call.1} parent=117 // pred_fallthru
          _
      $region118: #{tpu_custom_call.1} parent=5 // pred_fallthru
        _
      %p2491 = scmp.le.s32.totalorder 2, %s25
      // Predicated region
      $region127: #{tpu_custom_call.1} parent=5 // pred_check
        %p2492 = pneg %p2491
      $region128: #{tpu_custom_call.1} parent=5 // pred_check_branch
        %2494 = sbr.rel (%p2492) target = $region130
      $region129: #{tpu_custom_call.1} parent=5 // pred_region
        %s2495 = ssub.s32 %s25, 2
        // Predicated region
        $region131: #{tpu_custom_call.1} parent=129 // pred_check
          %p2496 = pneg %p400
        $region132: #{tpu_custom_call.1} parent=129 // pred_check_branch
          %2498 = sbr.rel (%p2496) target = $region134
        $region133: #{tpu_custom_call.1} parent=129 // pred_region
          %s2499 = sand.u32 %s385, 1
          %s2500 = scalar_lea.sflag [#allocation4], %s2499
          %s2501 = sand.u32 %s385, 1
          %s2502 = smul.addr %s2501, 8
          %s2503 = scalar_lea.vmem [#allocation3], %s2502
          %2504 = dma.done %s2500, 128
        $region134: #{tpu_custom_call.1} parent=129 // pred_fallthru
          _
      $region130: #{tpu_custom_call.1} parent=5 // pred_fallthru
        _
    $region6: #{tpu_custom_call.1} parent=1 // loop_footer
      %s29 = sadd.s32 1, %s25
    $region7: #{tpu_custom_call.1} parent=1 // loop_footer_branch
      %24 = sbr.rel target = $region3
    $region8: #{tpu_custom_call.1} parent=1 // loop_exit
      _
    %2505 = vsyncpa [#allocation4], 1
    %s2506 = scalar_lea.sflag [#allocation4], 1
    %2507 = vsyncpa %s2506, 1

</llo_original>
